<compile_context>
chip_gen: v7x
topology: tpu7x:2x2x1
jax: 0.10.0
libtpu: 0.0.40
codegen_flags: <defaults>
</compile_context>

<pallas_src>
import jax
import jax.numpy as jnp
from jax.experimental import pallas as pl
from jax.experimental.pallas import tpu as pltpu


# ----------------------------------------------------------------------------
# Pallas kernel: fused dual 1x1 conv (W_cat @ X) + bias + stage-2 residual add
# ----------------------------------------------------------------------------
def _fused_conv1x1_kernel(x_ref, f2_ref, w_ref, b_ref, out2_ref, y1_ref):
    # x_ref:    (gb, Cin, tm)   18-channel offsets, lane axis = flattened pixels
    # f2_ref:   (gb, C2,  tm)   stage-2 features (residual)
    # w_ref:    (C2+C1, Cin)    fused [W2; W1]
    # b_ref:    (C2+C1, 1)      fused [b2; b1]
    # out2_ref: (gb, C2,  tm)   f2 + W2 @ x + b2
    # y1_ref:   (gb, C1,  tm)   W1 @ x + b1   (still at stage-2 resolution)
    c2 = out2_ref.shape[1]
    gb = x_ref.shape[0]
    w = w_ref[...].astype(jnp.float32)
    b = b_ref[...].astype(jnp.float32)
    # gb is small and static (<= 8); the unrolled per-view dots keep each grid
    # step's work >= ~2K lane elements even at low resolutions.
    for g in range(gb):
        x = x_ref[g].astype(jnp.float32)
        y = jnp.dot(w, x, preferred_element_type=jnp.float32) + b
        out2_ref[g] = (f2_ref[g].astype(jnp.float32) + y[:c2, :]).astype(out2_ref.dtype)
        y1_ref[g] = y[c2:, :].astype(y1_ref.dtype)


# ----------------------------------------------------------------------------
# Tiling heuristics
# ----------------------------------------------------------------------------
_LANE_TILE_CAP = 16384          # elements; ~13 MiB f32 double-buffered working set
_G_UNROLL_CAP = 8               # max view-batches unrolled per grid step
_TARGET_LANE_ELEMS = 2048       # amortize ~600-cycle per-grid-step overhead
_VMEM_LIMIT_BYTES = 48 * 1024 * 1024   # > v5e/v6e scoped defaults, < v7x physical


def _largest_divisor_leq(n, cap):
    cap = max(1, min(n, cap))
    for d in range(cap, 0, -1):
        if n % d == 0:
            return d
    return 1


def _pick_lane_tile(m, cap=_LANE_TILE_CAP):
    """Lane tile + number of M blocks.  Never exceeds `cap` elements."""
    if m <= cap:
        return m, 1
    t = (cap // 128) * 128
    while t >= 128:
        if m % t == 0:
            return t, m // t
        t -= 128
    # No dividing multiple-of-128 tile <= cap: capped tile + padded edge block
    # (cdiv grid).  Columns are independent, so padded lanes are dropped.
    t = (cap // 128) * 128
    return t, pl.cdiv(m, t)


def _pick_g_block(g, n_m_blocks, tm):
    want = max(1, min(_G_UNROLL_CAP, -(-_TARGET_LANE_ELEMS // tm)))
    gb = _largest_divisor_leq(g, want)
    # Keep >= 2 total grid steps when possible so both v7x TensorCores get work.
    if g > 1 and n_m_blocks * (g // gb) < 2:
        gb = _largest_divisor_leq(g, max(1, g // 2))
    return gb


# ----------------------------------------------------------------------------
# pallas_call wrapper
# ----------------------------------------------------------------------------
def fused_patch_linears(x, f2, w_cat, b_cat, c2, y1_dtype=None):
    """x: (G, Cin, M) offsets, f2: (G, C2, M) stage-2 features.

    Returns (out2, y1):
      out2 = f2 + W2 @ x + b2                (G, C2, M)
      y1   =      W1 @ x + b1                (G, C1, M)   (stage-2 resolution)
    """
    g_dim, c_in, m = x.shape
    c_tot = w_cat.shape[0]
    c1 = c_tot - c2
    if y1_dtype is None:
        y1_dtype = f2.dtype

    tm, n_m = _pick_lane_tile(m)
    gb = _pick_g_block(g_dim, n_m, tm)
    grid = (g_dim // gb, n_m)

    out2, y1 = pl.pallas_call(
        _fused_conv1x1_kernel,
        out_shape=(
            jax.ShapeDtypeStruct((g_dim, c2, m), f2.dtype),
            jax.ShapeDtypeStruct((g_dim, c1, m), y1_dtype),
        ),
        grid_spec=pltpu.PrefetchScalarGridSpec(
            num_scalar_prefetch=0,
            grid=grid,
            in_specs=[
                pl.BlockSpec((gb, c_in, tm), lambda g, i: (g, 0, i)),
                pl.BlockSpec((gb, c2, tm), lambda g, i: (g, 0, i)),
                pl.BlockSpec((c_tot, c_in), lambda g, i: (0, 0)),
                pl.BlockSpec((c_tot, 1), lambda g, i: (0, 0)),
            ],
            out_specs=[
                pl.BlockSpec((gb, c2, tm), lambda g, i: (g, 0, i)),
                pl.BlockSpec((gb, c1, tm), lambda g, i: (g, 0, i)),
            ],
        ),
        compiler_params=pltpu.CompilerParams(
            dimension_semantics=("parallel", "parallel"),
            vmem_limit_bytes=_VMEM_LIMIT_BYTES,
        ),
        # NOTE: no input_output_aliases -- caller-owned feature buffers are not
        # donated, so XLA would insert a defensive copy to honor the alias.
    )(x, f2, w_cat, b_cat)
    return out2, y1


# ----------------------------------------------------------------------------
# Glue helpers (match the torch ops used by Patch.forward)
# ----------------------------------------------------------------------------
def nearest_upsample_2x(x_nchw):
    """F.interpolate(x, scale_factor=2, mode='nearest') for NCHW (reference only)."""
    x = jnp.repeat(x_nchw, 2, axis=2)
    x = jnp.repeat(x, 2, axis=3)
    return x


def unbind_and_invert(proj_stage):
    """torch.unbind(proj, 1) + torch.inverse(ref_proj)."""
    views = [proj_stage[:, v].astype(jnp.float32) for v in range(proj_stage.shape[1])]
    ref_proj, src_projs = views[0], views[1:]
    return jnp.linalg.inv(ref_proj), src_projs


def conv1x1_residual_ref(offset, weight, bias, feature):
    """Plain-JAX reference: feature + Conv2d(offset, 1x1 weight, bias)."""
    y = jnp.einsum('ncHW,oc->noHW', offset.astype(jnp.float32),
                   weight.astype(jnp.float32))
    return feature.astype(jnp.float32) + y + bias[None, :, None, None]


# ----------------------------------------------------------------------------
# Patch module (JAX / Pallas version)
# ----------------------------------------------------------------------------
class PatchPallas:
    def __init__(self, evaluate_neighbors=(9, 9, 9), n_views=5, seed=42):
        num_features = [8, 16, 32, 64]
        self.n_views = n_views
        self.c2 = num_features[2]   # 32 (Linear2 out channels)
        self.c1 = num_features[1]   # 16 (Linear1 out channels)
        cin = evaluate_neighbors[0] * 2  # 18
        k1, k2, k3, k4 = jax.random.split(jax.random.PRNGKey(seed), 4)
        # nn.Conv2d(18, 32, 1) and nn.Conv2d(18, 16, 1) weights (deterministic init)
        self.w2 = 0.05 * jax.random.normal(k1, (self.c2, cin), jnp.float32)
        self.b2 = 0.05 * jax.random.normal(k2, (self.c2,), jnp.float32)
        self.w1 = 0.05 * jax.random.normal(k3, (self.c1, cin), jnp.float32)
        self.b1 = 0.05 * jax.random.normal(k4, (self.c1,), jnp.float32)
        # Fused weights so each offset tensor is streamed from HBM exactly once.
        self.w_cat = jnp.concatenate([self.w2, self.w1], axis=0)           # (48, 18)
        self.b_cat = jnp.concatenate([self.b2, self.b1], axis=0)[:, None]  # (48, 1)
        self._forward_jit = jax.jit(self._forward_impl)

    def forward(self, offsets, feats2, feats1, depth_min, proj_matrices, depth_max):
        return self._forward_jit(offsets, feats2, feats1, depth_min,
                                 proj_matrices, depth_max)

    def _forward_impl(self, offsets, feats2, feats1, depth_min, proj_matrices,
                      depth_max):
        """
        offsets : (V, B, 18, H2, W2) per-view 18-channel offsets at stage-2 res
                  (view V-1 is the ref view, matching src_offset[n_views-1]).
        feats2  : (V, B, 32, H2, W2) stage-2 features (view V-1 = ref view).
        feats1  : (V, B, 16, H1, W1) stage-1 features (H1=2*H2, W1=2*W2).
        proj_matrices: dict 'stage_0'..'stage_3' -> (B, n_views, 4, 4).
        Returns ({'stage_2': (V,B,32,H2,W2), 'stage_1': (V,B,16,H1,W1)}, ref_proj_invs)
        with the `feature += conv(offset)` residual applied per view.
        """
        V, B, Cin, H2, W2 = offsets.shape
        C2 = feats2.shape[2]
        C1, H1, W1 = feats1.shape[2], feats1.shape[3], feats1.shape[4]
        assert H1 == 2 * H2 and W1 == 2 * W2
        M2 = H2 * W2

        ref_proj_invs = {s: unbind_and_invert(proj_matrices[s])[0]
                         for s in proj_matrices}

        # Pure (free) row-major reshapes -- no stacks, no transposes.
        x = offsets.reshape(V * B, Cin, M2)
        f2 = feats2.reshape(V * B, C2, M2)

        # Single Pallas call: stage-2 residual conv + stage-1 conv (shared read
        # of x).  y1 is emitted in bf16 (intermediate only -> half the traffic).
        out2_flat, y1_flat = fused_patch_linears(
            x, f2, self.w_cat, self.b_cat, C2, y1_dtype=jnp.bfloat16)

        out2 = out2_flat.reshape(V, B, C2, H2, W2)

        # Stage 1: conv1x1(upsample2x(offset)) == upsample2x(conv1x1(offset)).
        # The 2x nearest replication + residual add is a broadcast+add that XLA
        # fuses into a single pass over the stage-1 features.
        y1 = y1_flat.reshape(V, B, C1, H2, 1, W2, 1)
        f1v = feats1.reshape(V, B, C1, H2, 2, W2, 2)
        out1 = (f1v + y1).astype(feats1.dtype).reshape(V, B, C1, H1, W1)

        out_features = {'stage_2': out2, 'stage_1': out1}
        # TODO(synk): self.patchmatch_1/2/3 calls skipped (PatchMatch undefined
        # in the provided source); depth / score / view_weights not produced.
        return out_features, ref_proj_invs


# ----------------------------------------------------------------------------
# Self-test
# ----------------------------------------------------------------------------
if __name__ == "__main__":
    key = jax.random.PRNGKey(0)
    B, n_views = 2, 5
    num_features = [8, 16, 32, 64]
    H2, W2 = 8, 8        # stage-2 resolution
    H1, W1 = 16, 16      # stage-1 resolution
    dtype = jnp.bfloat16  # bf16 hot path (review recommendation)

    ks = jax.random.split(key, 8)
    # Pre-stacked view tensors (no jnp.stack copies anywhere in the hot path).
    offsets = jax.random.normal(ks[0], (n_views, B, 18, H2, W2),
                                jnp.float32).astype(dtype)
    feats2 = jax.random.normal(ks[1], (n_views, B, num_features[2], H2, W2),
                               jnp.float32).astype(dtype)
    feats1 = jax.random.normal(ks[2], (n_views, B, num_features[1], H1, W1),
                               jnp.float32).astype(dtype)

    # projection matrices: identity + small perturbation (invertible)
    proj_matrices = {}
    for s in range(4):
        noise = 0.01 * jax.random.normal(ks[3 + s], (B, n_views, 4, 4), jnp.float32)
        proj_matrices[f'stage_{s}'] = (jnp.eye(4, dtype=jnp.float32)[None, None]
                                       + noise)

    depth_min = jnp.full((B,), 0.5, jnp.float32)
    depth_max = jnp.full((B,), 10.0, jnp.float32)

    model = PatchPallas(n_views=n_views)
    out_features, ref_proj_invs = model.forward(
        offsets, feats2, feats1, depth_min, proj_matrices, depth_max)
    jax.block_until_ready(out_features)
    jax.block_until_ready(ref_proj_invs)

    out2 = out_features['stage_2'].astype(jnp.float32)
    out1 = out_features['stage_1'].astype(jnp.float32)

    # ---- correctness checks vs plain-JAX reference (same bf16 inputs) ----
    atol = rtol = 3e-2  # bf16 output rounding; kernel accumulates in f32

    # stage 2, ref view (index n_views-1)
    ref2_expected = conv1x1_residual_ref(offsets[n_views - 1], model.w2,
                                         model.b2, feats2[n_views - 1])
    assert jnp.allclose(out2[n_views - 1], ref2_expected, atol=atol, rtol=rtol)
    # stage 2, src view 1
    src2_expected = conv1x1_residual_ref(offsets[1], model.w2, model.b2, feats2[1])
    assert jnp.allclose(out2[1], src2_expected, atol=atol, rtol=rtol)
    # stage 1, src view 0 (torch path: conv on the 2x-upsampled offset)
    off_up0 = nearest_upsample_2x(offsets[0].astype(jnp.float32))
    src1_expected = conv1x1_residual_ref(off_up0, model.w1, model.b1, feats1[0])
    assert jnp.allclose(out1[0], src1_expected, atol=atol, rtol=rtol)
    # stage 1, ref view
    off_upr = nearest_upsample_2x(offsets[n_views - 1].astype(jnp.float32))
    ref1_expected = conv1x1_residual_ref(off_upr, model.w1, model.b1,
                                         feats1[n_views - 1])
    assert jnp.allclose(out1[n_views - 1], ref1_expected, atol=atol, rtol=rtol)

    print("KERNEL_OK")
</pallas_src>

<mosaic_0001>
module attributes {stable_mosaic.version = 11 : i64} {
  func.func @_fused_conv1x1_kernel(%arg0: i32, %arg1: i32, %arg2: memref<5x18x64xbf16, #tpu.memory_space<vmem>>, %arg3: memref<5x32x64xbf16, #tpu.memory_space<vmem>>, %arg4: memref<48x18xf32, #tpu.memory_space<vmem>>, %arg5: memref<48x1xf32, #tpu.memory_space<vmem>>, %arg6: memref<5x32x64xbf16, #tpu.memory_space<vmem>>, %arg7: memref<5x16x64xbf16, #tpu.memory_space<vmem>>) attributes {dimension_semantics = [#tpu.dimension_semantics<parallel>, #tpu.dimension_semantics<parallel>], iteration_bounds = array<i64: 2, 1>, scalar_prefetch = 0 : i64, scratch_operands = 0 : i64, tpu.core_type = #tpu.core_type<tc>, window_params = [{transform_indices = @transform_0, window_bounds = array<i64: 5, 18, 64>}, {transform_indices = @transform_1, window_bounds = array<i64: 5, 32, 64>}, {pipeline_mode = #tpu.pipeline_mode<synchronous>, transform_indices = @transform_2, window_bounds = array<i64: 48, 18>}, {pipeline_mode = #tpu.pipeline_mode<synchronous>, transform_indices = @transform_3, window_bounds = array<i64: 48, 1>}, {transform_indices = @transform_4, window_bounds = array<i64: 5, 32, 64>}, {transform_indices = @transform_5, window_bounds = array<i64: 5, 16, 64>}]} {
    %c0 = arith.constant 0 : index
    %c0_0 = arith.constant 0 : index
    %0 = vector.load %arg4[%c0, %c0_0] : memref<48x18xf32, #tpu.memory_space<vmem>>, vector<48x18xf32>
    %c0_1 = arith.constant 0 : index
    %c0_2 = arith.constant 0 : index
    %1 = vector.load %arg5[%c0_1, %c0_2] : memref<48x1xf32, #tpu.memory_space<vmem>>, vector<48x1xf32>
    %c0_3 = arith.constant 0 : index
    %c0_4 = arith.constant 0 : index
    %c0_5 = arith.constant 0 : index
    %2 = vector.load %arg2[%c0_3, %c0_4, %c0_5] : memref<5x18x64xbf16, #tpu.memory_space<vmem>>, vector<1x18x64xbf16>
    %3 = vector.shape_cast %2 : vector<1x18x64xbf16> to vector<18x64xbf16>
    %4 = arith.extf %3 : vector<18x64xbf16> to vector<18x64xf32>
    %cst = arith.constant dense<0.000000e+00> : vector<48x64xf32>
    %5 = tpu.matmul %0, %4, %cst {dimension_numbers = #tpu.dot_dimension_numbers<[1], [0], [0], [1], [0, 0, 1, 1], [], []>} : vector<48x18xf32>, vector<18x64xf32>, vector<48x64xf32> -> vector<48x64xf32>
    %6 = vector.broadcast %1 : vector<48x1xf32> to vector<48x64xf32>
    %7 = arith.addf %5, %6 : vector<48x64xf32>
    %c0_6 = arith.constant 0 : index
    %c0_7 = arith.constant 0 : index
    %c0_8 = arith.constant 0 : index
    %8 = vector.load %arg3[%c0_6, %c0_7, %c0_8] : memref<5x32x64xbf16, #tpu.memory_space<vmem>>, vector<1x32x64xbf16>
    %9 = vector.shape_cast %8 : vector<1x32x64xbf16> to vector<32x64xbf16>
    %10 = arith.extf %9 : vector<32x64xbf16> to vector<32x64xf32>
    %11 = vector.extract_strided_slice %7 {offsets = [0, 0], sizes = [32, 64], strides = [1, 1]} : vector<48x64xf32> to vector<32x64xf32>
    %12 = arith.addf %10, %11 : vector<32x64xf32>
    %13 = arith.truncf %12 : vector<32x64xf32> to vector<32x64xbf16>
    %c0_9 = arith.constant 0 : index
    %c0_10 = arith.constant 0 : index
    %c0_11 = arith.constant 0 : index
    %14 = vector.load %arg6[%c0_9, %c0_10, %c0_11] : memref<5x32x64xbf16, #tpu.memory_space<vmem>>, vector<1x32x64xbf16>
    %15 = vector.shape_cast %14 : vector<1x32x64xbf16> to vector<32x64xbf16>
    %16 = vector.shape_cast %13 : vector<32x64xbf16> to vector<1x32x64xbf16>
    tpu.vector_store %arg6[%c0_9, %c0_10, %c0_11], %16 {strides = array<i32>} : memref<5x32x64xbf16, #tpu.memory_space<vmem>>, vector<1x32x64xbf16>,
    %17 = vector.extract_strided_slice %7 {offsets = [32, 0], sizes = [16, 64], strides = [1, 1]} : vector<48x64xf32> to vector<16x64xf32>
    %18 = arith.truncf %17 : vector<16x64xf32> to vector<16x64xbf16>
    %c0_12 = arith.constant 0 : index
    %c0_13 = arith.constant 0 : index
    %c0_14 = arith.constant 0 : index
    %19 = vector.load %arg7[%c0_12, %c0_13, %c0_14] : memref<5x16x64xbf16, #tpu.memory_space<vmem>>, vector<1x16x64xbf16>
    %20 = vector.shape_cast %19 : vector<1x16x64xbf16> to vector<16x64xbf16>
    %21 = vector.shape_cast %18 : vector<16x64xbf16> to vector<1x16x64xbf16>
    tpu.vector_store %arg7[%c0_12, %c0_13, %c0_14], %21 {strides = array<i32>} : memref<5x16x64xbf16, #tpu.memory_space<vmem>>, vector<1x16x64xbf16>,
    %c1 = arith.constant 1 : index
    %c0_15 = arith.constant 0 : index
    %c0_16 = arith.constant 0 : index
    %22 = vector.load %arg2[%c1, %c0_15, %c0_16] : memref<5x18x64xbf16, #tpu.memory_space<vmem>>, vector<1x18x64xbf16>
    %23 = vector.shape_cast %22 : vector<1x18x64xbf16> to vector<18x64xbf16>
    %24 = arith.extf %23 : vector<18x64xbf16> to vector<18x64xf32>
    %cst_17 = arith.constant dense<0.000000e+00> : vector<48x64xf32>
    %25 = tpu.matmul %0, %24, %cst_17 {dimension_numbers = #tpu.dot_dimension_numbers<[1], [0], [0], [1], [0, 0, 1, 1], [], []>} : vector<48x18xf32>, vector<18x64xf32>, vector<48x64xf32> -> vector<48x64xf32>
    %26 = vector.broadcast %1 : vector<48x1xf32> to vector<48x64xf32>
    %27 = arith.addf %25, %26 : vector<48x64xf32>
    %c1_18 = arith.constant 1 : index
    %c0_19 = arith.constant 0 : index
    %c0_20 = arith.constant 0 : index
    %28 = vector.load %arg3[%c1_18, %c0_19, %c0_20] : memref<5x32x64xbf16, #tpu.memory_space<vmem>>, vector<1x32x64xbf16>
    %29 = vector.shape_cast %28 : vector<1x32x64xbf16> to vector<32x64xbf16>
    %30 = arith.extf %29 : vector<32x64xbf16> to vector<32x64xf32>
    %31 = vector.extract_strided_slice %27 {offsets = [0, 0], sizes = [32, 64], strides = [1, 1]} : vector<48x64xf32> to vector<32x64xf32>
    %32 = arith.addf %30, %31 : vector<32x64xf32>
    %33 = arith.truncf %32 : vector<32x64xf32> to vector<32x64xbf16>
    %c1_21 = arith.constant 1 : index
    %c0_22 = arith.constant 0 : index
    %c0_23 = arith.constant 0 : index
    %34 = vector.load %arg6[%c1_21, %c0_22, %c0_23] : memref<5x32x64xbf16, #tpu.memory_space<vmem>>, vector<1x32x64xbf16>
    %35 = vector.shape_cast %34 : vector<1x32x64xbf16> to vector<32x64xbf16>
    %36 = vector.shape_cast %33 : vector<32x64xbf16> to vector<1x32x64xbf16>
    tpu.vector_store %arg6[%c1_21, %c0_22, %c0_23], %36 {strides = array<i32>} : memref<5x32x64xbf16, #tpu.memory_space<vmem>>, vector<1x32x64xbf16>,
    %37 = vector.extract_strided_slice %27 {offsets = [32, 0], sizes = [16, 64], strides = [1, 1]} : vector<48x64xf32> to vector<16x64xf32>
    %38 = arith.truncf %37 : vector<16x64xf32> to vector<16x64xbf16>
    %c1_24 = arith.constant 1 : index
    %c0_25 = arith.constant 0 : index
    %c0_26 = arith.constant 0 : index
    %39 = vector.load %arg7[%c1_24, %c0_25, %c0_26] : memref<5x16x64xbf16, #tpu.memory_space<vmem>>, vector<1x16x64xbf16>
    %40 = vector.shape_cast %39 : vector<1x16x64xbf16> to vector<16x64xbf16>
    %41 = vector.shape_cast %38 : vector<16x64xbf16> to vector<1x16x64xbf16>
    tpu.vector_store %arg7[%c1_24, %c0_25, %c0_26], %41 {strides = array<i32>} : memref<5x16x64xbf16, #tpu.memory_space<vmem>>, vector<1x16x64xbf16>,
    %c2 = arith.constant 2 : index
    %c0_27 = arith.constant 0 : index
    %c0_28 = arith.constant 0 : index
    %42 = vector.load %arg2[%c2, %c0_27, %c0_28] : memref<5x18x64xbf16, #tpu.memory_space<vmem>>, vector<1x18x64xbf16>
    %43 = vector.shape_cast %42 : vector<1x18x64xbf16> to vector<18x64xbf16>
    %44 = arith.extf %43 : vector<18x64xbf16> to vector<18x64xf32>
    %cst_29 = arith.constant dense<0.000000e+00> : vector<48x64xf32>
    %45 = tpu.matmul %0, %44, %cst_29 {dimension_numbers = #tpu.dot_dimension_numbers<[1], [0], [0], [1], [0, 0, 1, 1], [], []>} : vector<48x18xf32>, vector<18x64xf32>, vector<48x64xf32> -> vector<48x64xf32>
    %46 = vector.broadcast %1 : vector<48x1xf32> to vector<48x64xf32>
    %47 = arith.addf %45, %46 : vector<48x64xf32>
    %c2_30 = arith.constant 2 : index
    %c0_31 = arith.constant 0 : index
    %c0_32 = arith.constant 0 : index
    %48 = vector.load %arg3[%c2_30, %c0_31, %c0_32] : memref<5x32x64xbf16, #tpu.memory_space<vmem>>, vector<1x32x64xbf16>
    %49 = vector.shape_cast %48 : vector<1x32x64xbf16> to vector<32x64xbf16>
    %50 = arith.extf %49 : vector<32x64xbf16> to vector<32x64xf32>
    %51 = vector.extract_strided_slice %47 {offsets = [0, 0], sizes = [32, 64], strides = [1, 1]} : vector<48x64xf32> to vector<32x64xf32>
    %52 = arith.addf %50, %51 : vector<32x64xf32>
    %53 = arith.truncf %52 : vector<32x64xf32> to vector<32x64xbf16>
    %c2_33 = arith.constant 2 : index
    %c0_34 = arith.constant 0 : index
    %c0_35 = arith.constant 0 : index
    %54 = vector.load %arg6[%c2_33, %c0_34, %c0_35] : memref<5x32x64xbf16, #tpu.memory_space<vmem>>, vector<1x32x64xbf16>
    %55 = vector.shape_cast %54 : vector<1x32x64xbf16> to vector<32x64xbf16>
    %56 = vector.shape_cast %53 : vector<32x64xbf16> to vector<1x32x64xbf16>
    tpu.vector_store %arg6[%c2_33, %c0_34, %c0_35], %56 {strides = array<i32>} : memref<5x32x64xbf16, #tpu.memory_space<vmem>>, vector<1x32x64xbf16>,
    %57 = vector.extract_strided_slice %47 {offsets = [32, 0], sizes = [16, 64], strides = [1, 1]} : vector<48x64xf32> to vector<16x64xf32>
    %58 = arith.truncf %57 : vector<16x64xf32> to vector<16x64xbf16>
    %c2_36 = arith.constant 2 : index
    %c0_37 = arith.constant 0 : index
    %c0_38 = arith.constant 0 : index
    %59 = vector.load %arg7[%c2_36, %c0_37, %c0_38] : memref<5x16x64xbf16, #tpu.memory_space<vmem>>, vector<1x16x64xbf16>
    %60 = vector.shape_cast %59 : vector<1x16x64xbf16> to vector<16x64xbf16>
    %61 = vector.shape_cast %58 : vector<16x64xbf16> to vector<1x16x64xbf16>
    tpu.vector_store %arg7[%c2_36, %c0_37, %c0_38], %61 {strides = array<i32>} : memref<5x16x64xbf16, #tpu.memory_space<vmem>>, vector<1x16x64xbf16>,
    %c3 = arith.constant 3 : index
    %c0_39 = arith.constant 0 : index
    %c0_40 = arith.constant 0 : index
    %62 = vector.load %arg2[%c3, %c0_39, %c0_40] : memref<5x18x64xbf16, #tpu.memory_space<vmem>>, vector<1x18x64xbf16>
    %63 = vector.shape_cast %62 : vector<1x18x64xbf16> to vector<18x64xbf16>
    %64 = arith.extf %63 : vector<18x64xbf16> to vector<18x64xf32>
    %cst_41 = arith.constant dense<0.000000e+00> : vector<48x64xf32>
    %65 = tpu.matmul %0, %64, %cst_41 {dimension_numbers = #tpu.dot_dimension_numbers<[1], [0], [0], [1], [0, 0, 1, 1], [], []>} : vector<48x18xf32>, vector<18x64xf32>, vector<48x64xf32> -> vector<48x64xf32>
    %66 = vector.broadcast %1 : vector<48x1xf32> to vector<48x64xf32>
    %67 = arith.addf %65, %66 : vector<48x64xf32>
    %c3_42 = arith.constant 3 : index
    %c0_43 = arith.constant 0 : index
    %c0_44 = arith.constant 0 : index
    %68 = vector.load %arg3[%c3_42, %c0_43, %c0_44] : memref<5x32x64xbf16, #tpu.memory_space<vmem>>, vector<1x32x64xbf16>
    %69 = vector.shape_cast %68 : vector<1x32x64xbf16> to vector<32x64xbf16>
    %70 = arith.extf %69 : vector<32x64xbf16> to vector<32x64xf32>
    %71 = vector.extract_strided_slice %67 {offsets = [0, 0], sizes = [32, 64], strides = [1, 1]} : vector<48x64xf32> to vector<32x64xf32>
    %72 = arith.addf %70, %71 : vector<32x64xf32>
    %73 = arith.truncf %72 : vector<32x64xf32> to vector<32x64xbf16>
    %c3_45 = arith.constant 3 : index
    %c0_46 = arith.constant 0 : index
    %c0_47 = arith.constant 0 : index
    %74 = vector.load %arg6[%c3_45, %c0_46, %c0_47] : memref<5x32x64xbf16, #tpu.memory_space<vmem>>, vector<1x32x64xbf16>
    %75 = vector.shape_cast %74 : vector<1x32x64xbf16> to vector<32x64xbf16>
    %76 = vector.shape_cast %73 : vector<32x64xbf16> to vector<1x32x64xbf16>
    tpu.vector_store %arg6[%c3_45, %c0_46, %c0_47], %76 {strides = array<i32>} : memref<5x32x64xbf16, #tpu.memory_space<vmem>>, vector<1x32x64xbf16>,
    %77 = vector.extract_strided_slice %67 {offsets = [32, 0], sizes = [16, 64], strides = [1, 1]} : vector<48x64xf32> to vector<16x64xf32>
    %78 = arith.truncf %77 : vector<16x64xf32> to vector<16x64xbf16>
    %c3_48 = arith.constant 3 : index
    %c0_49 = arith.constant 0 : index
    %c0_50 = arith.constant 0 : index
    %79 = vector.load %arg7[%c3_48, %c0_49, %c0_50] : memref<5x16x64xbf16, #tpu.memory_space<vmem>>, vector<1x16x64xbf16>
    %80 = vector.shape_cast %79 : vector<1x16x64xbf16> to vector<16x64xbf16>
    %81 = vector.shape_cast %78 : vector<16x64xbf16> to vector<1x16x64xbf16>
    tpu.vector_store %arg7[%c3_48, %c0_49, %c0_50], %81 {strides = array<i32>} : memref<5x16x64xbf16, #tpu.memory_space<vmem>>, vector<1x16x64xbf16>,
    %c4 = arith.constant 4 : index
    %c0_51 = arith.constant 0 : index
    %c0_52 = arith.constant 0 : index
    %82 = vector.load %arg2[%c4, %c0_51, %c0_52] : memref<5x18x64xbf16, #tpu.memory_space<vmem>>, vector<1x18x64xbf16>
    %83 = vector.shape_cast %82 : vector<1x18x64xbf16> to vector<18x64xbf16>
    %84 = arith.extf %83 : vector<18x64xbf16> to vector<18x64xf32>
    %cst_53 = arith.constant dense<0.000000e+00> : vector<48x64xf32>
    %85 = tpu.matmul %0, %84, %cst_53 {dimension_numbers = #tpu.dot_dimension_numbers<[1], [0], [0], [1], [0, 0, 1, 1], [], []>} : vector<48x18xf32>, vector<18x64xf32>, vector<48x64xf32> -> vector<48x64xf32>
    %86 = vector.broadcast %1 : vector<48x1xf32> to vector<48x64xf32>
    %87 = arith.addf %85, %86 : vector<48x64xf32>
    %c4_54 = arith.constant 4 : index
    %c0_55 = arith.constant 0 : index
    %c0_56 = arith.constant 0 : index
    %88 = vector.load %arg3[%c4_54, %c0_55, %c0_56] : memref<5x32x64xbf16, #tpu.memory_space<vmem>>, vector<1x32x64xbf16>
    %89 = vector.shape_cast %88 : vector<1x32x64xbf16> to vector<32x64xbf16>
    %90 = arith.extf %89 : vector<32x64xbf16> to vector<32x64xf32>
    %91 = vector.extract_strided_slice %87 {offsets = [0, 0], sizes = [32, 64], strides = [1, 1]} : vector<48x64xf32> to vector<32x64xf32>
    %92 = arith.addf %90, %91 : vector<32x64xf32>
    %93 = arith.truncf %92 : vector<32x64xf32> to vector<32x64xbf16>
    %c4_57 = arith.constant 4 : index
    %c0_58 = arith.constant 0 : index
    %c0_59 = arith.constant 0 : index
    %94 = vector.load %arg6[%c4_57, %c0_58, %c0_59] : memref<5x32x64xbf16, #tpu.memory_space<vmem>>, vector<1x32x64xbf16>
    %95 = vector.shape_cast %94 : vector<1x32x64xbf16> to vector<32x64xbf16>
    %96 = vector.shape_cast %93 : vector<32x64xbf16> to vector<1x32x64xbf16>
    tpu.vector_store %arg6[%c4_57, %c0_58, %c0_59], %96 {strides = array<i32>} : memref<5x32x64xbf16, #tpu.memory_space<vmem>>, vector<1x32x64xbf16>,
    %97 = vector.extract_strided_slice %87 {offsets = [32, 0], sizes = [16, 64], strides = [1, 1]} : vector<48x64xf32> to vector<16x64xf32>
    %98 = arith.truncf %97 : vector<16x64xf32> to vector<16x64xbf16>
    %c4_60 = arith.constant 4 : index
    %c0_61 = arith.constant 0 : index
    %c0_62 = arith.constant 0 : index
    %99 = vector.load %arg7[%c4_60, %c0_61, %c0_62] : memref<5x16x64xbf16, #tpu.memory_space<vmem>>, vector<1x16x64xbf16>
    %100 = vector.shape_cast %99 : vector<1x16x64xbf16> to vector<16x64xbf16>
    %101 = vector.shape_cast %98 : vector<16x64xbf16> to vector<1x16x64xbf16>
    tpu.vector_store %arg7[%c4_60, %c0_61, %c0_62], %101 {strides = array<i32>} : memref<5x16x64xbf16, #tpu.memory_space<vmem>>, vector<1x16x64xbf16>,
    return
  }
  func.func @transform_0(%arg0: i32, %arg1: i32) -> (i32, i32, i32) {
    %c0_i32 = arith.constant 0 : i32
    %c0_i32_0 = arith.constant 0 : i32
    return %arg0, %c0_i32, %arg1 : i32, i32, i32
  }
  func.func @transform_1(%arg0: i32, %arg1: i32) -> (i32, i32, i32) {
    %c0_i32 = arith.constant 0 : i32
    %c0_i32_0 = arith.constant 0 : i32
    return %arg0, %c0_i32, %arg1 : i32, i32, i32
  }
  func.func @transform_2(%arg0: i32, %arg1: i32) -> (i32, i32) {
    %c0_i32 = arith.constant 0 : i32
    %c0_i32_0 = arith.constant 0 : i32
    %c0_i32_1 = arith.constant 0 : i32
    return %c0_i32, %c0_i32_0 : i32, i32
  }
  func.func @transform_3(%arg0: i32, %arg1: i32) -> (i32, i32) {
    %c0_i32 = arith.constant 0 : i32
    %c0_i32_0 = arith.constant 0 : i32
    %c0_i32_1 = arith.constant 0 : i32
    return %c0_i32, %c0_i32_0 : i32, i32
  }
  func.func @transform_4(%arg0: i32, %arg1: i32) -> (i32, i32, i32) {
    %c0_i32 = arith.constant 0 : i32
    %c0_i32_0 = arith.constant 0 : i32
    return %arg0, %c0_i32, %arg1 : i32, i32, i32
  }
  func.func @transform_5(%arg0: i32, %arg1: i32) -> (i32, i32, i32) {
    %c0_i32 = arith.constant 0 : i32
    %c0_i32_0 = arith.constant 0 : i32
    return %arg0, %c0_i32, %arg1 : i32, i32, i32
  }
}

</mosaic_0001>

<llo_original>
// kernel: custom-call.36
$region0: #{custom-call.36}
  %s0 = inlined_call_operand.vmem [shape: f32[2,4,4], index: 0, kind: input, shape index: {}]
  %s1 = inlined_call_operand.vmem [shape: f32[2,4,4], index: 1, kind: output, shape index: {0}]
  %s2 = inlined_call_operand.hbm [shape: s32[2,4], index: 2, kind: output, shape index: {1}]
  %s3 = inlined_call_operand.vmem [shape: s32[2,4], index: 3, kind: output, shape index: {2}]
  %4 = xla_tuple %s1, %s2, %s3
  $region1: #{custom-call.36} parent=0
    #allocation0 [shape = 'u8[4096]{0}', space=vmem, size = 0x1000, scoped, tag = 'operand span for operand 0']
    #allocation1 [shape = 'u8[4096]{0}', space=vmem, size = 0x1000, scoped, tag = 'packed  for operand 0']
    #allocation2 [shape = 'u8[4096]{0}', space=vmem, size = 0x1000, scoped, tag = 'operand span for operand 1']
    #allocation3 [shape = 'u8[4096]{0}', space=vmem, size = 0x1000, scoped, tag = 'packed  for operand 1']
    #allocation4 [shape = 'u8[4096]{0}', space=vmem, size = 0x1000, scoped, tag = 'operand span for operand 2']
    #allocation5 [shape = 'u8[2048]{0}', space=vmem, size = 0x800, scoped, tag = 'packed  for operand 2']
    #allocation6 [shape = 's32[2]{0}', space=sflag, size = 0x8, scoped, tag = 'scoped memory for custom-call.36']
    #allocation7 [shape = 'u8[4096]{0}', space=vmem, size = 0x1000, scoped, tag = 'operand span for operand 3']
    #allocation8 [shape = 'u8[2048]{0}', space=vmem, size = 0x800, scoped, tag = 'packed  for operand 3']
    %5 = vsyncpa [#allocation6], 0
    %s6 = scalar_lea.sflag [#allocation6], 1
    %7 = vsyncpa %s6, 0
    loop: start=0, step=1, limit=4
    $region2: #{custom-call.36} parent=1 // loop_pre_header
      _
    $region3: #{custom-call.36} parent=1 // loop_header
      %s9 = sphi 0, %s13
      %p10 = scmp.ge.s32.totalorder %s9, 4
      %s21 = sphi 0, %s23
      %s24 = sphi 0, %s21
      %s25 = sphi 0, %s24
      %s41 = sphi 0, %s25
      %s49 = sphi 0, %s51
      %s52 = sphi 0, %s49
      %s53 = sphi 0, %s52
      %s69 = sphi 0, %s53
    $region4: #{custom-call.36} parent=1 // loop_header_branch
      %12 = sbr.rel (%p10) target = $region8
    $region5: #{custom-call.36} parent=1 // loop_body
      %s14 = ssub.s32 %s9, 1
      %s15 = ssub.s32 %s9, 2
      %s16 = sadd.s32 %s9, 1
      %s17 = sshrl.u32 %s9, 3
      %s18 = sshrl.u32 %s16, 3
      %s19 = ssub.s32 %s17, %s18
      %p20 = scmp.eq.s32.totalorder %s19, 0
      %s22 = sadd.s32 %s21, 1
      %s23 = scalar_select %p20, %s21, %s22
      %p26 = pneg %p20
      %p27 = scmp.eq.s32.totalorder %s9, 1
      %p28 = por %p26, %p27
      %p29 = scmp.ne.s32.totalorder %s21, %s24
      %p30 = scmp.eq.s32.totalorder %s9, 0
      %p31 = por %p29, %p30
      %p32 = scmp.ne.s32.totalorder %s21, %s24
      %p33 = scmp.eq.s32.totalorder %s14, 1
      %p34 = por %p32, %p33
      %p35 = scmp.ne.s32.totalorder %s24, %s25
      %p36 = scmp.eq.s32.totalorder %s14, 0
      %p37 = por %p35, %p36
      %p38 = scmp.ne.s32.totalorder %s24, %s25
      %p39 = scmp.eq.s32.totalorder %s15, 1
      %p40 = por %p38, %p39
      %p42 = scmp.ne.s32.totalorder %s25, %s41
      %p43 = scmp.eq.s32.totalorder %s15, 0
      %p44 = por %p42, %p43
      %s45 = sshrl.u32 %s9, 3
      %s46 = sshrl.u32 %s16, 3
      %s47 = ssub.s32 %s45, %s46
      %p48 = scmp.eq.s32.totalorder %s47, 0
      %s50 = sadd.s32 %s49, 1
      %s51 = scalar_select %p48, %s49, %s50
      %p54 = pneg %p48
      %p55 = scmp.eq.s32.totalorder %s9, 1
      %p56 = por %p54, %p55
      %p57 = scmp.ne.s32.totalorder %s49, %s52
      %p58 = scmp.eq.s32.totalorder %s9, 0
      %p59 = por %p57, %p58
      %p60 = scmp.ne.s32.totalorder %s49, %s52
      %p61 = scmp.eq.s32.totalorder %s14, 1
      %p62 = por %p60, %p61
      %p63 = scmp.ne.s32.totalorder %s52, %s53
      %p64 = scmp.eq.s32.totalorder %s14, 0
      %p65 = por %p63, %p64
      %p66 = scmp.ne.s32.totalorder %s52, %s53
      %p67 = scmp.eq.s32.totalorder %s15, 1
      %p68 = por %p66, %p67
      %p70 = scmp.ne.s32.totalorder %s53, %s69
      %p71 = scmp.eq.s32.totalorder %s15, 0
      %p72 = por %p70, %p71
      %p73 = scmp.le.s32.totalorder 1, %s9
      %p74 = scmp.lt.s32.totalorder %s9, 3
      %p75 = pnand %p73, %p74
      %p76 = pneg %p75
      // Predicated region
      $region9: #{custom-call.36} parent=5 // pred_check
        _
      $region10: #{custom-call.36} parent=5 // pred_check_branch
        %78 = sbr.rel (%p75) target = $region12
      $region11: #{custom-call.36} parent=5 // pred_region
        %s79 = ssub.s32 %s9, 1
      $region12: #{custom-call.36} parent=5 // pred_fallthru
        _
      %p80 = scmp.lt.s32.totalorder %s9, 2
      // Predicated region
      $region13: #{custom-call.36} parent=5 // pred_check
        %p81 = pneg %p80
      $region14: #{custom-call.36} parent=5 // pred_check_branch
        %83 = sbr.rel (%p81) target = $region16
      $region15: #{custom-call.36} parent=5 // pred_region
        %s84 = sand.u32 %s9, 1
        %s85 = sand.u32 %s9, 1
        %s86 = smul.addr %s85, 4
        %s87 = scalar_lea.vmem [#allocation1], %s86
        %s88 = smul.addr %s9, 4
        %s89 = scalar_lea.vmem %s0, %s88
        // Predicated region
        $region17: #{custom-call.36} parent=15 // pred_check
          _
        $region18: #{custom-call.36} parent=15 // pred_check_branch
          %91 = sbr.rel (0) target = $region20
        $region19: #{custom-call.36} parent=15 // pred_region
          // Predicated region
          $region21: #{custom-call.36} parent=19 // pred_check
            _
          $region22: #{custom-call.36} parent=19 // pred_check_branch
            %93 = sbr.rel target = $region24
          $region23: #{custom-call.36} parent=19 // pred_region
            // Predicated region
            $region36: #{custom-call.36} parent=23 // pred_check
              _
            $region37: #{custom-call.36} parent=23 // pred_check_branch
              %108 = sbr.rel (0) target = $region39
            $region38: #{custom-call.36} parent=23 // pred_region
              loop: start=0, step=1, limit=1
              $region40: #{custom-call.36} parent=38 // loop_pre_header
                _
              $region41: #{custom-call.36} parent=38 // loop_header
                %s111 = sphi 0, %s115
                %p112 = scmp.ge.s32.totalorder %s111, 1
                %s116 = sphi %s89, %s89
                %s117 = sphi %s87, %s87
              $region42: #{custom-call.36} parent=38 // loop_header_branch
                %114 = sbr.rel (%p112) target = $region46
              $region43: #{custom-call.36} parent=38 // loop_body
                %v118 = vld [vmem:[%s116] sm:$0xf]
                %119 = vst [vmem:[%s117] sm:$0xf] %v118
              $region44: #{custom-call.36} parent=38 // loop_footer
                %s115 = sadd.s32 1, %s111
              $region45: #{custom-call.36} parent=38 // loop_footer_branch
                %110 = sbr.rel target = $region41
              $region46: #{custom-call.36} parent=38 // loop_exit
                _
            $region39: #{custom-call.36} parent=23 // pred_fallthru
              _
          $region24: #{custom-call.36} parent=19 // pred_fallthru
            _
          // Predicated region
          $region25: #{custom-call.36} parent=19 // pred_check
            _
          $region26: #{custom-call.36} parent=19 // pred_check_branch
            %95 = sbr.rel (0) target = $region28
          $region27: #{custom-call.36} parent=19 // pred_region
            loop: start=0, step=1, limit=1
            $region29: #{custom-call.36} parent=27 // loop_pre_header
              _
            $region30: #{custom-call.36} parent=27 // loop_header
              %s98 = sphi 0, %s102
              %p99 = scmp.ge.s32.totalorder %s98, 1
              %s103 = sphi %s89, %s89
              %s104 = sphi %s87, %s87
            $region31: #{custom-call.36} parent=27 // loop_header_branch
              %101 = sbr.rel (%p99) target = $region35
            $region32: #{custom-call.36} parent=27 // loop_body
              %v105 = vld [vmem:[%s103] sm:$0xf]
              %106 = vst [vmem:[%s104] sm:$0xf] %v105
            $region33: #{custom-call.36} parent=27 // loop_footer
              %s102 = sadd.s32 1, %s98
            $region34: #{custom-call.36} parent=27 // loop_footer_branch
              %97 = sbr.rel target = $region30
            $region35: #{custom-call.36} parent=27 // loop_exit
              _
          $region28: #{custom-call.36} parent=19 // pred_fallthru
            _
        $region20: #{custom-call.36} parent=15 // pred_fallthru
          _
        %120 = vnop
      $region16: #{custom-call.36} parent=5 // pred_fallthru
        _
      %p121 = scmp.le.s32.totalorder 1, %s9
      %p122 = scmp.lt.s32.totalorder %s9, 3
      %p123 = pnand %p121, %p122
      %p124 = pneg %p123
      // Predicated region
      $region47: #{custom-call.36} parent=5 // pred_check
        _
      $region48: #{custom-call.36} parent=5 // pred_check_branch
        %126 = sbr.rel (%p123) target = $region50
      $region49: #{custom-call.36} parent=5 // pred_region
        #allocation9 [shape = 's32[4,128]{1,0}', space=vmem, size = 0x1000, scoped, tag = 'scratch for permutations']
        %s127 = ssub.s32 %s9, 1
        %s128 = sand.u32 %s14, 1
        %s129 = sand.u32 %s14, 1
        %s130 = smul.addr %s129, 4
        %s131 = scalar_lea.vmem [#allocation1], %s130
        %s132 = sand.u32 %s14, 1
        %s133 = sand.u32 %s14, 1
        %s134 = smul.addr %s133, 4
        %s135 = scalar_lea.vmem [#allocation1], %s134
        %s136 = sand.u32 %s14, 1
        %s137 = sand.u32 %s14, 1
        %s138 = smul.addr %s137, 4
        %s139 = scalar_lea.vmem [#allocation3], %s138
        %p140 = pneg %p37
        %p141 = pneg %p34
        %s142 = sand.u32 %s24, 1
        %s143 = scalar_lea.sflag [#allocation6], %s142
        %s144 = sand.u32 %s24, 1
        %s145 = smul.addr %s144, 2
        %s146 = scalar_lea.vmem [#allocation5], %s145
        %p147 = pneg %p65
        %p148 = pneg %p62
        %s149 = sand.u32 %s52, 1
        %s150 = sand.u32 %s52, 1
        %s151 = smul.addr %s150, 2
        %s152 = scalar_lea.vmem [#allocation8], %s151
        %s154 = sshllo.u32 0, 4
        %v155 = vld [vmem:[%s135] sm:%s154]
        %156 = vst [vmem:[#allocation0] sm:%s154] %v155
        %s157 = sshrl.u32 %s14, 3
        %s158 = sshrl.u32 %s14, 3
        %v159 = vld [vmem:[#allocation0] sm:$0xff]
        %160 = vst [vmem:[#allocation2] sm:$0xff] %v159
        %s161 = sand.u32 %s14, 7
        %s162 = scalar_lea.vmem [#allocation4], %s161
        %s163 = sand.u32 %s14, 7
        %s164 = scalar_lea.vmem [#allocation7], %s163
        %165 = vst [vmem:[%s162] sm:$0x1] 0
        %v166 = vlaneseq
        %v167 = vshrl.u32 %v166, 7
        %v168 = vmov %v167
        %170 = vst [vmem:[#allocation9] sm:$0xff] %v168
        loop: start=0, step=1, limit=4
        $region52: #{custom-call.36} parent=49 // loop_pre_header
          _
        $region53: #{custom-call.36} parent=49 // loop_header
          %s172 = sphi 0, %s176
          %p173 = scmp.ge.s32.totalorder %s172, 4
        $region54: #{custom-call.36} parent=49 // loop_header_branch
          %175 = sbr.rel (%p173) target = $region58
        $region55: #{custom-call.36} parent=49 // loop_body
          %v177 = vstv %s172
          %v178 = vlaneseq
          %v179 = vshrl.u32 %v178, 7
          %v180 = vmov %v179
          %v181 = vld [vmem:[#allocation2] sm:$0xff]
          %v182 = vand.u32 2147483647, %v181
          %v184 = vstv %s172
          %vm185 = vcmp.ge.s32.totalorder %v180, %v184
          %vm186 = vcmp.lt.s32.totalorder %v180, 4
          %vm187 = vmand %vm185, %vm186
          %vm188 = vcmp.lt.f32.partialorder -inf, %v182
          %vm189 = vmand %vm187, %vm188
          %v190 = vsel %vm189, %v180, %v177
          %v191 = vsel %vm189, %v182, -inf
          %v192 = vrot.slane %v191, 1
          %v193 = vrot.slane %v190, 1
          %vm194 = vcmp.ge.f32.partialorder %v192, %v191
          %v195 = vsel %vm194, %v192, %v191
          %v196 = vsel %vm194, %v193, %v190
          %v197 = vrot.slane %v192, 1
          %v198 = vrot.slane %v193, 1
          %vm199 = vcmp.ge.f32.partialorder %v197, %v195
          %v200 = vsel %vm199, %v197, %v195
          %v201 = vsel %vm199, %v198, %v196
          %v202 = vrot.slane %v197, 1
          %v203 = vrot.slane %v198, 1
          %vm204 = vcmp.ge.f32.partialorder %v202, %v200
          %v205 = vsel %vm204, %v202, %v200
          %v206 = vsel %vm204, %v203, %v201
          %v207 = vrot.slane %v202, 1
          %v208 = vrot.slane %v203, 1
          %vm209 = vcmp.ge.f32.partialorder %v207, %v205
          %v210 = vsel %vm209, %v207, %v205
          %v211 = vsel %vm209, %v208, %v206
          %v212 = vrot.slane %v207, 1
          %v213 = vrot.slane %v208, 1
          %vm214 = vcmp.ge.f32.partialorder %v212, %v210
          %v215 = vsel %vm214, %v212, %v210
          %v216 = vsel %vm214, %v213, %v211
          %v217 = vrot.slane %v212, 1
          %v218 = vrot.slane %v213, 1
          %vm219 = vcmp.ge.f32.partialorder %v217, %v215
          %v220 = vsel %vm219, %v217, %v215
          %v221 = vsel %vm219, %v218, %v216
          %v222 = vrot.slane %v217, 1
          %v223 = vrot.slane %v218, 1
          %vm224 = vcmp.ge.f32.partialorder %v222, %v220
          %v225 = vsel %vm224, %v222, %v220
          %v226 = vsel %vm224, %v223, %v221
          %s227 = ssub.s32 128, %s172
          %228 = vrot.lane.b32.xlu0 %v226, %s227
          %v229 = vpop.permute.xlu0 %228
          %s230 = vtos %v229
          %v231 = vstv %s172
          %v232 = vlaneseq
          %v233 = vand.u32 %v232, 127
          %vm234 = vcmp.eq.s32.totalorder %v233, %v231
          %v235 = vstv %s230
          %v236 = vld [vmem:[%s162] ss:$0 sm:$0xff]
          %v237 = vsel %vm234, %v235, %v236
          %238 = vst [vmem:[%s162] sm:$0x1] %v237
          %s239 = scalar_lea.vmem [#allocation2], %s172
          %s240 = scalar_lea.vmem [#allocation2], %s230
          %v241 = vld [vmem:[%s239] ss:$0 sm:$0xff]
          %v242 = vld [vmem:[%s240] ss:$0 sm:$0xff]
          %243 = vst [vmem:[%s240] sm:$0x1] %v241
          %244 = vst [vmem:[%s239] sm:$0x1] %v242
          %s245 = scalar_lea.vmem [#allocation9], %s172
          %s246 = scalar_lea.vmem [#allocation9], %s230
          %v247 = vld [vmem:[%s245] ss:$0 sm:$0xff]
          %v248 = vld [vmem:[%s246] ss:$0 sm:$0xff]
          %249 = vst [vmem:[%s246] sm:$0x1] %v247
          %250 = vst [vmem:[%s245] sm:$0x1] %v248
          %vm251 = vcmp.ne.f32.partialorder %v242, 0.0
          %vm252 = vmand %vm234, %vm251
          %v253 = vsel %vm252, %v242, 1.0
          %v254 = vlaneseq
          %v255 = vand.u32 %v254, 127
          %v256 = vstv %s172
          %vm257 = vcmp.gt.s32.totalorder %v255, %v256
          %v258 = vsel %vm257, %v242, 0.0
          %v259 = vlaneseq
          %v260 = vshrl.u32 %v259, 7
          %v261 = vmov %v260
          %v262 = vld [vmem:[#allocation2] sm:$0xff]
          %v264 = vstv %s172
          %vm265 = vcmp.gt.s32.totalorder %v261, %v264
          %v266 = vsel %vm265, %v253, 1.0
          %v267 = vrcp.pop %v266
          %v268 = vmul.f32 %v262, %v267
          %vm269 = vmand %vm265, %vm234
          %v270 = vsel %vm269, %v268, 0.0
          %271 = vadd.xlane.f32.xlu0 %v270
          %v272 = vpop.xlane.xlu0 %271
          %v273 = vmul.f32 %v272, %v258
          %v274 = vsub.f32 %v268, %v273
          %275 = vst [vmem:[#allocation2] sm:$0xff] %v274
        $region56: #{custom-call.36} parent=49 // loop_footer
          %s176 = sadd.s32 1, %s172
        $region57: #{custom-call.36} parent=49 // loop_footer_branch
          %171 = sbr.rel target = $region53
        $region58: #{custom-call.36} parent=49 // loop_exit
          _
        %v276 = vld [vmem:[#allocation9] sm:$0xff]
        %s277 = scalar_lea.vmem [#allocation9], 8
        %s278 = scalar_lea.vmem [#allocation9], 16
        %s279 = scalar_lea.vmem [#allocation9], 24
        %s280 = scalar_lea.vmem [#allocation9], 32
        %s281 = scalar_lea.vmem [#allocation9], 40
        %s282 = scalar_lea.vmem [#allocation9], 48
        %s283 = scalar_lea.vmem [#allocation9], 56
        %s284 = scalar_lea.vmem [#allocation9], 64
        %s285 = scalar_lea.vmem [#allocation9], 72
        %s286 = scalar_lea.vmem [#allocation9], 80
        %s287 = scalar_lea.vmem [#allocation9], 88
        %s288 = scalar_lea.vmem [#allocation9], 96
        %s289 = scalar_lea.vmem [#allocation9], 104
        %s290 = scalar_lea.vmem [#allocation9], 112
        %s291 = scalar_lea.vmem [#allocation9], 120
        %292 = vxpose.xlu0.b32.start [1/16] %v276, 128
        %293 = vxpose.xlu0.b32.cont [2/16] 0, 128
        %294 = vxpose.xlu0.b32.cont [3/16] 0, 128
        %295 = vxpose.xlu0.b32.cont [4/16] 0, 128
        %296 = vxpose.xlu0.b32.cont [5/16] 0, 128
        %297 = vxpose.xlu0.b32.cont [6/16] 0, 128
        %298 = vxpose.xlu0.b32.cont [7/16] 0, 128
        %299 = vxpose.xlu0.b32.cont [8/16] 0, 128
        %300 = vxpose.xlu0.b32.cont [9/16] 0, 128
        %301 = vxpose.xlu0.b32.cont [10/16] 0, 128
        %302 = vxpose.xlu0.b32.cont [11/16] 0, 128
        %303 = vxpose.xlu0.b32.cont [12/16] 0, 128
        %304 = vxpose.xlu0.b32.cont [13/16] 0, 128
        %305 = vxpose.xlu0.b32.cont [14/16] 0, 128
        %306 = vxpose.xlu0.b32.cont [15/16] 0, 128
        %307 = vxpose.xlu0.b32.end [16/16] 0, 128
        %v308 = vpop.trf.xlu0
        %v309 = vpop.trf.xlu0
        %v310 = vpop.trf.xlu0
        %v311 = vpop.trf.xlu0
        %v312 = vpop.trf.xlu0
        %v313 = vpop.trf.xlu0
        %v314 = vpop.trf.xlu0
        %v315 = vpop.trf.xlu0
        %v316 = vpop.trf.xlu0
        %v317 = vpop.trf.xlu0
        %v318 = vpop.trf.xlu0
        %v319 = vpop.trf.xlu0
        %v320 = vpop.trf.xlu0
        %v321 = vpop.trf.xlu0
        %v322 = vpop.trf.xlu0
        %v323 = vpop.trf.xlu0
        %324 = vst [vmem:[%s164] sm:$0x1] %v308
        %s326 = sshllo.u32 0, 4
        %v328 = vld [vmem:[#allocation2] sm:%s326]
        %s329 = sshllo.u32 0, 4
        %330 = vst [vmem:[%s139] sm:%s329] %v328
        %s332 = sshllo.u32 0, 2
        %v334 = vld [vmem:[#allocation4] sm:%s332]
        %s335 = sshllo.u32 0, 2
        %336 = vst [vmem:[%s146] sm:%s335] %v334
        %s338 = sshllo.u32 0, 2
        %v340 = vld [vmem:[#allocation7] sm:%s338]
        %s341 = sshllo.u32 0, 2
        %342 = vst [vmem:[%s152] sm:%s341] %v340
        %s343 = sand.u32 %s14, 1
        %s344 = sand.u32 %s14, 1
        %s345 = smul.addr %s344, 4
        %s346 = scalar_lea.vmem [#allocation3], %s345
        %s347 = sand.u32 %s24, 1
        %s348 = scalar_lea.sflag [#allocation6], %s347
        %s349 = sand.u32 %s24, 1
        %s350 = smul.addr %s349, 2
        %s351 = scalar_lea.vmem [#allocation5], %s350
        %s352 = sand.u32 %s52, 1
        %s353 = sand.u32 %s52, 1
        %s354 = smul.addr %s353, 2
        %s355 = scalar_lea.vmem [#allocation8], %s354
        %s356 = smul.addr %s14, 4
        %s357 = scalar_lea.vmem %s1, %s356
        // Predicated region
        $region59: #{custom-call.36} parent=49 // pred_check
          _
        $region60: #{custom-call.36} parent=49 // pred_check_branch
          %359 = sbr.rel (0) target = $region62
        $region61: #{custom-call.36} parent=49 // pred_region
          // Predicated region
          $region63: #{custom-call.36} parent=61 // pred_check
            _
          $region64: #{custom-call.36} parent=61 // pred_check_branch
            %361 = sbr.rel target = $region66
          $region65: #{custom-call.36} parent=61 // pred_region
            // Predicated region
            $region78: #{custom-call.36} parent=65 // pred_check
              _
            $region79: #{custom-call.36} parent=65 // pred_check_branch
              %376 = sbr.rel (0) target = $region81
            $region80: #{custom-call.36} parent=65 // pred_region
              loop: start=0, step=1, limit=1
              $region82: #{custom-call.36} parent=80 // loop_pre_header
                _
              $region83: #{custom-call.36} parent=80 // loop_header
                %s379 = sphi 0, %s383
                %p380 = scmp.ge.s32.totalorder %s379, 1
                %s384 = sphi %s346, %s346
                %s385 = sphi %s357, %s357
              $region84: #{custom-call.36} parent=80 // loop_header_branch
                %382 = sbr.rel (%p380) target = $region88
              $region85: #{custom-call.36} parent=80 // loop_body
                %v386 = vld [vmem:[%s384] sm:$0xf]
                %387 = vst [vmem:[%s385] sm:$0xf] %v386
              $region86: #{custom-call.36} parent=80 // loop_footer
                %s383 = sadd.s32 1, %s379
              $region87: #{custom-call.36} parent=80 // loop_footer_branch
                %378 = sbr.rel target = $region83
              $region88: #{custom-call.36} parent=80 // loop_exit
                _
            $region81: #{custom-call.36} parent=65 // pred_fallthru
              _
          $region66: #{custom-call.36} parent=61 // pred_fallthru
            _
          // Predicated region
          $region67: #{custom-call.36} parent=61 // pred_check
            _
          $region68: #{custom-call.36} parent=61 // pred_check_branch
            %363 = sbr.rel (0) target = $region70
          $region69: #{custom-call.36} parent=61 // pred_region
            loop: start=0, step=1, limit=1
            $region71: #{custom-call.36} parent=69 // loop_pre_header
              _
            $region72: #{custom-call.36} parent=69 // loop_header
              %s366 = sphi 0, %s370
              %p367 = scmp.ge.s32.totalorder %s366, 1
              %s371 = sphi %s346, %s346
              %s372 = sphi %s357, %s357
            $region73: #{custom-call.36} parent=69 // loop_header_branch
              %369 = sbr.rel (%p367) target = $region77
            $region74: #{custom-call.36} parent=69 // loop_body
              %v373 = vld [vmem:[%s371] sm:$0xf]
              %374 = vst [vmem:[%s372] sm:$0xf] %v373
            $region75: #{custom-call.36} parent=69 // loop_footer
              %s370 = sadd.s32 1, %s366
            $region76: #{custom-call.36} parent=69 // loop_footer_branch
              %365 = sbr.rel target = $region72
            $region77: #{custom-call.36} parent=69 // loop_exit
              _
          $region70: #{custom-call.36} parent=61 // pred_fallthru
            _
        $region62: #{custom-call.36} parent=49 // pred_fallthru
          _
        %388 = vnop
        // Predicated region
        $region89: #{custom-call.36} parent=49 // pred_check
          %p389 = pneg %p34
        $region90: #{custom-call.36} parent=49 // pred_check_branch
          %391 = sbr.rel (%p389) target = $region92
        $region91: #{custom-call.36} parent=49 // pred_region
          %s392 = sshrl.u32 %s14, 3
          %s394 = ssub.s32 32, 32
          %395 = vsyncadd %s348, %s394
          %s396 = smul.addr %s392, 32
          %s397 = scalar_lea.hbm %s2, %s396
          %s399 = sshll.u32 %s351, 4
          %s400 = int_to_ptr.vmem [resolvable:$true] %s399
          %402 = dma.vmem_to_hbm [thread:$0]  %s400, 32, %s397, %s348
        $region92: #{custom-call.36} parent=49 // pred_fallthru
          _
        // Predicated region
        $region93: #{custom-call.36} parent=49 // pred_check
          %p403 = pneg %p62
        $region94: #{custom-call.36} parent=49 // pred_check_branch
          %405 = sbr.rel (%p403) target = $region96
        $region95: #{custom-call.36} parent=49 // pred_region
          %s406 = sshrl.u32 %s14, 3
          %s407 = smul.addr %s406, 2
          %s408 = scalar_lea.vmem %s3, %s407
          // Predicated region
          $region97: #{custom-call.36} parent=95 // pred_check
            _
          $region98: #{custom-call.36} parent=95 // pred_check_branch
            %410 = sbr.rel (0) target = $region100
          $region99: #{custom-call.36} parent=95 // pred_region
            // Predicated region
            $region101: #{custom-call.36} parent=99 // pred_check
              _
            $region102: #{custom-call.36} parent=99 // pred_check_branch
              %412 = sbr.rel target = $region104
            $region103: #{custom-call.36} parent=99 // pred_region
              // Predicated region
              $region116: #{custom-call.36} parent=103 // pred_check
                _
              $region117: #{custom-call.36} parent=103 // pred_check_branch
                %427 = sbr.rel (0) target = $region119
              $region118: #{custom-call.36} parent=103 // pred_region
                loop: start=0, step=1, limit=1
                $region120: #{custom-call.36} parent=118 // loop_pre_header
                  _
                $region121: #{custom-call.36} parent=118 // loop_header
                  %s430 = sphi 0, %s434
                  %p431 = scmp.ge.s32.totalorder %s430, 1
                  %s435 = sphi %s355, %s355
                  %s436 = sphi %s408, %s408
                $region122: #{custom-call.36} parent=118 // loop_header_branch
                  %433 = sbr.rel (%p431) target = $region126
                $region123: #{custom-call.36} parent=118 // loop_body
                  %v437 = vld [vmem:[%s435] sm:$0x3]
                  %438 = vst [vmem:[%s436] sm:$0x3] %v437
                $region124: #{custom-call.36} parent=118 // loop_footer
                  %s434 = sadd.s32 1, %s430
                $region125: #{custom-call.36} parent=118 // loop_footer_branch
                  %429 = sbr.rel target = $region121
                $region126: #{custom-call.36} parent=118 // loop_exit
                  _
              $region119: #{custom-call.36} parent=103 // pred_fallthru
                _
            $region104: #{custom-call.36} parent=99 // pred_fallthru
              _
            // Predicated region
            $region105: #{custom-call.36} parent=99 // pred_check
              _
            $region106: #{custom-call.36} parent=99 // pred_check_branch
              %414 = sbr.rel (0) target = $region108
            $region107: #{custom-call.36} parent=99 // pred_region
              loop: start=0, step=1, limit=1
              $region109: #{custom-call.36} parent=107 // loop_pre_header
                _
              $region110: #{custom-call.36} parent=107 // loop_header
                %s417 = sphi 0, %s421
                %p418 = scmp.ge.s32.totalorder %s417, 1
                %s422 = sphi %s355, %s355
                %s423 = sphi %s408, %s408
              $region111: #{custom-call.36} parent=107 // loop_header_branch
                %420 = sbr.rel (%p418) target = $region115
              $region112: #{custom-call.36} parent=107 // loop_body
                %v424 = vld [vmem:[%s422] sm:$0x3]
                %425 = vst [vmem:[%s423] sm:$0x3] %v424
              $region113: #{custom-call.36} parent=107 // loop_footer
                %s421 = sadd.s32 1, %s417
              $region114: #{custom-call.36} parent=107 // loop_footer_branch
                %416 = sbr.rel target = $region110
              $region115: #{custom-call.36} parent=107 // loop_exit
                _
            $region108: #{custom-call.36} parent=99 // pred_fallthru
              _
          $region100: #{custom-call.36} parent=95 // pred_fallthru
            _
          %439 = vnop
        $region96: #{custom-call.36} parent=49 // pred_fallthru
          _
      $region50: #{custom-call.36} parent=5 // pred_fallthru
        _
      %p440 = scmp.le.s32.totalorder 2, %s9
      // Predicated region
      $region127: #{custom-call.36} parent=5 // pred_check
        %p441 = pneg %p440
      $region128: #{custom-call.36} parent=5 // pred_check_branch
        %443 = sbr.rel (%p441) target = $region130
      $region129: #{custom-call.36} parent=5 // pred_region
        %s444 = ssub.s32 %s9, 2
        %s445 = sand.u32 %s15, 1
        %s446 = sand.u32 %s15, 1
        %s447 = smul.addr %s446, 4
        %s448 = scalar_lea.vmem [#allocation3], %s447
        // Predicated region
        $region131: #{custom-call.36} parent=129 // pred_check
          %p449 = pneg %p40
        $region132: #{custom-call.36} parent=129 // pred_check_branch
          %451 = sbr.rel (%p449) target = $region134
        $region133: #{custom-call.36} parent=129 // pred_region
          %s452 = sand.u32 %s25, 1
          %s453 = scalar_lea.sflag [#allocation6], %s452
          %s454 = sand.u32 %s25, 1
          %s455 = smul.addr %s454, 2
          %s456 = scalar_lea.vmem [#allocation5], %s455
          %457 = dma.done %s453, 32
        $region134: #{custom-call.36} parent=129 // pred_fallthru
          _
        // Predicated region
        $region135: #{custom-call.36} parent=129 // pred_check
          %p458 = pneg %p68
        $region136: #{custom-call.36} parent=129 // pred_check_branch
          %460 = sbr.rel (%p458) target = $region138
        $region137: #{custom-call.36} parent=129 // pred_region
          %s461 = sand.u32 %s53, 1
          %s462 = sand.u32 %s53, 1
          %s463 = smul.addr %s462, 2
          %s464 = scalar_lea.vmem [#allocation8], %s463
        $region138: #{custom-call.36} parent=129 // pred_fallthru
          _
      $region130: #{custom-call.36} parent=5 // pred_fallthru
        _
    $region6: #{custom-call.36} parent=1 // loop_footer
      %s13 = sadd.s32 1, %s9
    $region7: #{custom-call.36} parent=1 // loop_footer_branch
      %8 = sbr.rel target = $region3
    $region8: #{custom-call.36} parent=1 // loop_exit
      _
    %465 = vsyncpa [#allocation6], 1
    %s466 = scalar_lea.sflag [#allocation6], 1
    %467 = vsyncpa %s466, 1

// kernel: custom-call.53
$region0: #{custom-call.53}
  %s0 = inlined_call_operand.vmem [shape: f32[2,1,4,4], index: 0, kind: input, shape index: {}]
  %s1 = inlined_call_operand.vmem [shape: f32[2,1,4,4], index: 1, kind: output, shape index: {}]
  $region1: #{custom-call.53} parent=0
    #allocation0 [shape = 'u8[4096]{0}', space=vmem, size = 0x1000, scoped, tag = 'operand span for operand 0']
    #allocation1 [shape = 'u8[4096]{0}', space=vmem, size = 0x1000, scoped, tag = 'packed  for operand 0']
    #allocation2 [shape = 'u8[4096]{0}', space=vmem, size = 0x1000, scoped, tag = 'operand span for operand 1']
    #allocation3 [shape = 'u8[4096]{0}', space=vmem, size = 0x1000, scoped, tag = 'packed  for operand 1']
    loop: start=0, step=1, limit=4
    $region2: #{custom-call.53} parent=1 // loop_pre_header
      _
    $region3: #{custom-call.53} parent=1 // loop_header
      %s3 = sphi 0, %s7
      %p4 = scmp.ge.s32.totalorder %s3, 4
      %s10 = sphi 0, %s36
      %s11 = sphi 0, %s32
      %s12 = sphi 0, %s28
      %s13 = sphi 0, %s24
      %s14 = sphi 0, %s10
      %s15 = sphi 0, %s11
      %s16 = sphi 0, %s12
      %s17 = sphi 0, %s13
      %s18 = sphi 0, %s14
      %s19 = sphi 0, %s15
      %s20 = sphi 0, %s16
      %s21 = sphi 0, %s17
    $region4: #{custom-call.53} parent=1 // loop_header_branch
      %6 = sbr.rel (%p4) target = $region8
    $region5: #{custom-call.53} parent=1 // loop_body
      %s8 = ssub.s32 %s3, 1
      %s9 = ssub.s32 %s3, 2
      %s22 = sadd.s32 1, %s13
      %p23 = scmp.ge.s32.totalorder %s22, 1
      %s24 = scalar_select %p23, 0, %s22
      %s25 = sadd.s32 1, %s12
      %s26 = scalar_select %p23, %s25, %s12
      %p27 = scmp.ge.s32.totalorder %s26, 1
      %s28 = scalar_select %p27, 0, %s26
      %s29 = sadd.s32 1, %s11
      %s30 = scalar_select %p27, %s29, %s11
      %p31 = scmp.ge.s32.totalorder %s30, 1
      %s32 = scalar_select %p31, 0, %s30
      %s33 = sadd.s32 1, %s10
      %s34 = scalar_select %p31, %s33, %s10
      %p35 = scmp.ge.s32.totalorder %s34, 2
      %s36 = scalar_select %p35, 0, %s34
      %p37 = scmp.le.s32.totalorder 1, %s3
      %p38 = scmp.lt.s32.totalorder %s3, 3
      %p39 = pnand %p37, %p38
      %p40 = pneg %p39
      // Predicated region
      $region9: #{custom-call.53} parent=5 // pred_check
        _
      $region10: #{custom-call.53} parent=5 // pred_check_branch
        %42 = sbr.rel (%p39) target = $region12
      $region11: #{custom-call.53} parent=5 // pred_region
        %s43 = ssub.s32 %s3, 1
      $region12: #{custom-call.53} parent=5 // pred_fallthru
        _
      %p44 = scmp.lt.s32.totalorder %s3, 2
      // Predicated region
      $region13: #{custom-call.53} parent=5 // pred_check
        %p45 = pneg %p44
      $region14: #{custom-call.53} parent=5 // pred_check_branch
        %47 = sbr.rel (%p45) target = $region16
      $region15: #{custom-call.53} parent=5 // pred_region
        %s48 = sand.u32 %s3, 1
        %s49 = sand.u32 %s3, 1
        %s50 = smul.addr %s49, 4
        %s51 = scalar_lea.vmem [#allocation1], %s50
        %s52 = sadd.s32 %s13, %s12
        %s53 = sadd.s32 %s52, %s11
        %s54 = sadd.s32 %s53, %s10
        %s55 = smul.addr %s54, 4
        %s56 = scalar_lea.vmem %s0, %s55
        // Predicated region
        $region17: #{custom-call.53} parent=15 // pred_check
          _
        $region18: #{custom-call.53} parent=15 // pred_check_branch
          %58 = sbr.rel (0) target = $region20
        $region19: #{custom-call.53} parent=15 // pred_region
          // Predicated region
          $region21: #{custom-call.53} parent=19 // pred_check
            _
          $region22: #{custom-call.53} parent=19 // pred_check_branch
            %60 = sbr.rel target = $region24
          $region23: #{custom-call.53} parent=19 // pred_region
            // Predicated region
            $region36: #{custom-call.53} parent=23 // pred_check
              _
            $region37: #{custom-call.53} parent=23 // pred_check_branch
              %75 = sbr.rel (0) target = $region39
            $region38: #{custom-call.53} parent=23 // pred_region
              loop: start=0, step=1, limit=1
              $region40: #{custom-call.53} parent=38 // loop_pre_header
                _
              $region41: #{custom-call.53} parent=38 // loop_header
                %s78 = sphi 0, %s82
                %p79 = scmp.ge.s32.totalorder %s78, 1
                %s83 = sphi %s56, %s56
                %s84 = sphi %s51, %s51
              $region42: #{custom-call.53} parent=38 // loop_header_branch
                %81 = sbr.rel (%p79) target = $region46
              $region43: #{custom-call.53} parent=38 // loop_body
                %v85 = vld [vmem:[%s83] sm:$0xf]
                %86 = vst [vmem:[%s84] sm:$0xf] %v85
              $region44: #{custom-call.53} parent=38 // loop_footer
                %s82 = sadd.s32 1, %s78
              $region45: #{custom-call.53} parent=38 // loop_footer_branch
                %77 = sbr.rel target = $region41
              $region46: #{custom-call.53} parent=38 // loop_exit
                _
            $region39: #{custom-call.53} parent=23 // pred_fallthru
              _
          $region24: #{custom-call.53} parent=19 // pred_fallthru
            _
          // Predicated region
          $region25: #{custom-call.53} parent=19 // pred_check
            _
          $region26: #{custom-call.53} parent=19 // pred_check_branch
            %62 = sbr.rel (0) target = $region28
          $region27: #{custom-call.53} parent=19 // pred_region
            loop: start=0, step=1, limit=1
            $region29: #{custom-call.53} parent=27 // loop_pre_header
              _
            $region30: #{custom-call.53} parent=27 // loop_header
              %s65 = sphi 0, %s69
              %p66 = scmp.ge.s32.totalorder %s65, 1
              %s70 = sphi %s56, %s56
              %s71 = sphi %s51, %s51
            $region31: #{custom-call.53} parent=27 // loop_header_branch
              %68 = sbr.rel (%p66) target = $region35
            $region32: #{custom-call.53} parent=27 // loop_body
              %v72 = vld [vmem:[%s70] sm:$0xf]
              %73 = vst [vmem:[%s71] sm:$0xf] %v72
            $region33: #{custom-call.53} parent=27 // loop_footer
              %s69 = sadd.s32 1, %s65
            $region34: #{custom-call.53} parent=27 // loop_footer_branch
              %64 = sbr.rel target = $region30
            $region35: #{custom-call.53} parent=27 // loop_exit
              _
          $region28: #{custom-call.53} parent=19 // pred_fallthru
            _
        $region20: #{custom-call.53} parent=15 // pred_fallthru
          _
        %87 = vnop
      $region16: #{custom-call.53} parent=5 // pred_fallthru
        _
      %p88 = scmp.le.s32.totalorder 1, %s3
      %p89 = scmp.lt.s32.totalorder %s3, 3
      %p90 = pnand %p88, %p89
      %p91 = pneg %p90
      // Predicated region
      $region47: #{custom-call.53} parent=5 // pred_check
        _
      $region48: #{custom-call.53} parent=5 // pred_check_branch
        %93 = sbr.rel (%p90) target = $region50
      $region49: #{custom-call.53} parent=5 // pred_region
        #allocation4 [shape = 'f32[4,4]{1,0}', space=vmem, size = 0x1000, scoped, tag = 'rescaled input a']
        %s94 = ssub.s32 %s3, 1
        %s95 = sand.u32 %s8, 1
        %s96 = sand.u32 %s8, 1
        %s97 = smul.addr %s96, 4
        %s98 = scalar_lea.vmem [#allocation1], %s97
        %s99 = sand.u32 %s8, 1
        %s100 = sand.u32 %s8, 1
        %s101 = smul.addr %s100, 4
        %s102 = scalar_lea.vmem [#allocation1], %s101
        %s103 = sand.u32 %s8, 1
        %s104 = sand.u32 %s8, 1
        %s105 = smul.addr %s104, 4
        %s106 = scalar_lea.vmem [#allocation3], %s105
        %s108 = sshllo.u32 0, 4
        %v109 = vld [vmem:[%s102] sm:%s108]
        %110 = vst [vmem:[#allocation0] sm:%s108] %v109
        %v111 = vlaneseq
        %v112 = vand.u32 %v111, 127
        %vm113 = vcmp.lt.s32.totalorder %v112, 4
        %v114 = vlaneseq
        %v115 = vshrl.u32 %v114, 7
        %vm117 = vcmp.eq.s32.totalorder %v115, %v112
        %v118 = vld [vmem:[#allocation0] sm:$0xff]
        %v119 = vsel %vm117, %v118, 0.0
        %120 = vadd.xlane.f32.xlu0 %v119
        %v121 = vpop.xlane.xlu0 %120
        %vm122 = vcmp.ge.s32.totalorder %v115, %v112
        %vm123 = vmand %vm122, %vm113
        %v124 = vsel %vm123, %v118, 0.0
        %v125 = vrcp.pop %v121
        %v126 = vmul.f32 %v124, %v125
        %127 = vst [vmem:[#allocation4] sm:$0xff] %v126
        %v128 = vlaneseq
        %v129 = vand.u32 %v128, 127
        %v130 = vlaneseq
        %v131 = vshrl.u32 %v130, 7
        %vm133 = vcmp.eq.s32.totalorder %v129, %v131
        %v134 = vlaneseq
        %v135 = vand.u32 %v134, 127
        %vm136 = vcmp.eq.s32.totalorder %v135, 0
        %v137 = vsel %vm136, 1.0, -1.0
        %v138 = vsel %vm133, %v137, 0.0
        %s139 = scalar_lea.vmem [#allocation4], 1
        %v140 = vld [vmem:[%s139] ss:$0 sm:$0xff]
        %v141 = vxor.u32 %v140, 2147483648
        %v142 = vlaneseq
        %v143 = vand.u32 %v142, 127
        %vm144 = vcmp.eq.s32.totalorder %v143, 1
        %v145 = vmul.f32 %v141, %v138
        %146 = vadd.xlane.f32.xlu0 %v145
        %v147 = vpop.xlane.xlu0 %146
        %v148 = vsel %vm144, %v147, %v138
        %s149 = scalar_lea.vmem [#allocation4], 2
        %v150 = vld [vmem:[%s149] ss:$0 sm:$0xff]
        %v151 = vxor.u32 %v150, 2147483648
        %v152 = vlaneseq
        %v153 = vand.u32 %v152, 127
        %vm154 = vcmp.eq.s32.totalorder %v153, 2
        %v155 = vmul.f32 %v151, %v148
        %156 = vadd.xlane.f32.xlu0 %v155
        %v157 = vpop.xlane.xlu0 %156
        %v158 = vsel %vm154, %v157, %v148
        %s159 = scalar_lea.vmem [#allocation4], 3
        %v160 = vld [vmem:[%s159] ss:$0 sm:$0xff]
        %v161 = vxor.u32 %v160, 2147483648
        %v162 = vlaneseq
        %v163 = vand.u32 %v162, 127
        %vm164 = vcmp.eq.s32.totalorder %v163, 3
        %v165 = vmul.f32 %v161, %v158
        %166 = vadd.xlane.f32.xlu0 %v165
        %v167 = vpop.xlane.xlu0 %166
        %v168 = vsel %vm164, %v167, %v158
        %v169 = vrcp.pop %v121
        %v170 = vmul.f32 %v168, %v169
        %vm171 = vweird.f32 %v121
        %v172 = vsel %vm171, %v168, %v170
        %173 = vst [vmem:[#allocation2] sm:$0xff] %v172
        %s175 = sshllo.u32 0, 4
        %v177 = vld [vmem:[#allocation2] sm:%s175]
        %s178 = sshllo.u32 0, 4
        %179 = vst [vmem:[%s106] sm:%s178] %v177
        %s180 = sand.u32 %s8, 1
        %s181 = sand.u32 %s8, 1
        %s182 = smul.addr %s181, 4
        %s183 = scalar_lea.vmem [#allocation3], %s182
        %s184 = sadd.s32 %s17, %s16
        %s185 = sadd.s32 %s184, %s15
        %s186 = sadd.s32 %s185, %s14
        %s187 = smul.addr %s186, 4
        %s188 = scalar_lea.vmem %s1, %s187
        // Predicated region
        $region51: #{custom-call.53} parent=49 // pred_check
          _
        $region52: #{custom-call.53} parent=49 // pred_check_branch
          %190 = sbr.rel (0) target = $region54
        $region53: #{custom-call.53} parent=49 // pred_region
          // Predicated region
          $region55: #{custom-call.53} parent=53 // pred_check
            _
          $region56: #{custom-call.53} parent=53 // pred_check_branch
            %192 = sbr.rel target = $region58
          $region57: #{custom-call.53} parent=53 // pred_region
            // Predicated region
            $region70: #{custom-call.53} parent=57 // pred_check
              _
            $region71: #{custom-call.53} parent=57 // pred_check_branch
              %207 = sbr.rel (0) target = $region73
            $region72: #{custom-call.53} parent=57 // pred_region
              loop: start=0, step=1, limit=1
              $region74: #{custom-call.53} parent=72 // loop_pre_header
                _
              $region75: #{custom-call.53} parent=72 // loop_header
                %s210 = sphi 0, %s214
                %p211 = scmp.ge.s32.totalorder %s210, 1
                %s215 = sphi %s183, %s183
                %s216 = sphi %s188, %s188
              $region76: #{custom-call.53} parent=72 // loop_header_branch
                %213 = sbr.rel (%p211) target = $region80
              $region77: #{custom-call.53} parent=72 // loop_body
                %v217 = vld [vmem:[%s215] sm:$0xf]
                %218 = vst [vmem:[%s216] sm:$0xf] %v217
              $region78: #{custom-call.53} parent=72 // loop_footer
                %s214 = sadd.s32 1, %s210
              $region79: #{custom-call.53} parent=72 // loop_footer_branch
                %209 = sbr.rel target = $region75
              $region80: #{custom-call.53} parent=72 // loop_exit
                _
            $region73: #{custom-call.53} parent=57 // pred_fallthru
              _
          $region58: #{custom-call.53} parent=53 // pred_fallthru
            _
          // Predicated region
          $region59: #{custom-call.53} parent=53 // pred_check
            _
          $region60: #{custom-call.53} parent=53 // pred_check_branch
            %194 = sbr.rel (0) target = $region62
          $region61: #{custom-call.53} parent=53 // pred_region
            loop: start=0, step=1, limit=1
            $region63: #{custom-call.53} parent=61 // loop_pre_header
              _
            $region64: #{custom-call.53} parent=61 // loop_header
              %s197 = sphi 0, %s201
              %p198 = scmp.ge.s32.totalorder %s197, 1
              %s202 = sphi %s183, %s183
              %s203 = sphi %s188, %s188
            $region65: #{custom-call.53} parent=61 // loop_header_branch
              %200 = sbr.rel (%p198) target = $region69
            $region66: #{custom-call.53} parent=61 // loop_body
              %v204 = vld [vmem:[%s202] sm:$0xf]
              %205 = vst [vmem:[%s203] sm:$0xf] %v204
            $region67: #{custom-call.53} parent=61 // loop_footer
              %s201 = sadd.s32 1, %s197
            $region68: #{custom-call.53} parent=61 // loop_footer_branch
              %196 = sbr.rel target = $region64
            $region69: #{custom-call.53} parent=61 // loop_exit
              _
          $region62: #{custom-call.53} parent=53 // pred_fallthru
            _
        $region54: #{custom-call.53} parent=49 // pred_fallthru
          _
        %219 = vnop
      $region50: #{custom-call.53} parent=5 // pred_fallthru
        _
      %p220 = scmp.le.s32.totalorder 2, %s3
      // Predicated region
      $region81: #{custom-call.53} parent=5 // pred_check
        %p221 = pneg %p220
      $region82: #{custom-call.53} parent=5 // pred_check_branch
        %223 = sbr.rel (%p221) target = $region84
      $region83: #{custom-call.53} parent=5 // pred_region
        %s224 = ssub.s32 %s3, 2
        %s225 = sand.u32 %s9, 1
        %s226 = sand.u32 %s9, 1
        %s227 = smul.addr %s226, 4
        %s228 = scalar_lea.vmem [#allocation3], %s227
      $region84: #{custom-call.53} parent=5 // pred_fallthru
        _
    $region6: #{custom-call.53} parent=1 // loop_footer
      %s7 = sadd.s32 1, %s3
    $region7: #{custom-call.53} parent=1 // loop_footer_branch
      %2 = sbr.rel target = $region3
    $region8: #{custom-call.53} parent=1 // loop_exit
      _

// kernel: custom-call.52
$region0: #{custom-call.52}
  %s0 = inlined_call_operand.vmem [shape: f32[2,1,4,4], index: 0, kind: input, shape index: {}]
  %s1 = inlined_call_operand.vmem [shape: f32[2,1,4,4], index: 1, kind: output, shape index: {}]
  $region1: #{custom-call.52} parent=0
    #allocation0 [shape = 'u8[4096]{0}', space=vmem, size = 0x1000, scoped, tag = 'operand span for operand 0']
    #allocation1 [shape = 'u8[4096]{0}', space=vmem, size = 0x1000, scoped, tag = 'packed  for operand 0']
    #allocation2 [shape = 'u8[4096]{0}', space=vmem, size = 0x1000, scoped, tag = 'operand span for operand 1']
    #allocation3 [shape = 'u8[4096]{0}', space=vmem, size = 0x1000, scoped, tag = 'packed  for operand 1']
    loop: start=0, step=1, limit=4
    $region2: #{custom-call.52} parent=1 // loop_pre_header
      _
    $region3: #{custom-call.52} parent=1 // loop_header
      %s3 = sphi 0, %s7
      %p4 = scmp.ge.s32.totalorder %s3, 4
      %s10 = sphi 0, %s36
      %s11 = sphi 0, %s32
      %s12 = sphi 0, %s28
      %s13 = sphi 0, %s24
      %s14 = sphi 0, %s10
      %s15 = sphi 0, %s11
      %s16 = sphi 0, %s12
      %s17 = sphi 0, %s13
      %s18 = sphi 0, %s14
      %s19 = sphi 0, %s15
      %s20 = sphi 0, %s16
      %s21 = sphi 0, %s17
    $region4: #{custom-call.52} parent=1 // loop_header_branch
      %6 = sbr.rel (%p4) target = $region8
    $region5: #{custom-call.52} parent=1 // loop_body
      %s8 = ssub.s32 %s3, 1
      %s9 = ssub.s32 %s3, 2
      %s22 = sadd.s32 1, %s13
      %p23 = scmp.ge.s32.totalorder %s22, 1
      %s24 = scalar_select %p23, 0, %s22
      %s25 = sadd.s32 1, %s12
      %s26 = scalar_select %p23, %s25, %s12
      %p27 = scmp.ge.s32.totalorder %s26, 1
      %s28 = scalar_select %p27, 0, %s26
      %s29 = sadd.s32 1, %s11
      %s30 = scalar_select %p27, %s29, %s11
      %p31 = scmp.ge.s32.totalorder %s30, 1
      %s32 = scalar_select %p31, 0, %s30
      %s33 = sadd.s32 1, %s10
      %s34 = scalar_select %p31, %s33, %s10
      %p35 = scmp.ge.s32.totalorder %s34, 2
      %s36 = scalar_select %p35, 0, %s34
      %p37 = scmp.le.s32.totalorder 1, %s3
      %p38 = scmp.lt.s32.totalorder %s3, 3
      %p39 = pnand %p37, %p38
      %p40 = pneg %p39
      // Predicated region
      $region9: #{custom-call.52} parent=5 // pred_check
        _
      $region10: #{custom-call.52} parent=5 // pred_check_branch
        %42 = sbr.rel (%p39) target = $region12
      $region11: #{custom-call.52} parent=5 // pred_region
        %s43 = ssub.s32 %s3, 1
      $region12: #{custom-call.52} parent=5 // pred_fallthru
        _
      %p44 = scmp.lt.s32.totalorder %s3, 2
      // Predicated region
      $region13: #{custom-call.52} parent=5 // pred_check
        %p45 = pneg %p44
      $region14: #{custom-call.52} parent=5 // pred_check_branch
        %47 = sbr.rel (%p45) target = $region16
      $region15: #{custom-call.52} parent=5 // pred_region
        %s48 = sand.u32 %s3, 1
        %s49 = sand.u32 %s3, 1
        %s50 = smul.addr %s49, 4
        %s51 = scalar_lea.vmem [#allocation1], %s50
        %s52 = sadd.s32 %s13, %s12
        %s53 = sadd.s32 %s52, %s11
        %s54 = sadd.s32 %s53, %s10
        %s55 = smul.addr %s54, 4
        %s56 = scalar_lea.vmem %s0, %s55
        // Predicated region
        $region17: #{custom-call.52} parent=15 // pred_check
          _
        $region18: #{custom-call.52} parent=15 // pred_check_branch
          %58 = sbr.rel (0) target = $region20
        $region19: #{custom-call.52} parent=15 // pred_region
          // Predicated region
          $region21: #{custom-call.52} parent=19 // pred_check
            _
          $region22: #{custom-call.52} parent=19 // pred_check_branch
            %60 = sbr.rel target = $region24
          $region23: #{custom-call.52} parent=19 // pred_region
            // Predicated region
            $region36: #{custom-call.52} parent=23 // pred_check
              _
            $region37: #{custom-call.52} parent=23 // pred_check_branch
              %75 = sbr.rel (0) target = $region39
            $region38: #{custom-call.52} parent=23 // pred_region
              loop: start=0, step=1, limit=1
              $region40: #{custom-call.52} parent=38 // loop_pre_header
                _
              $region41: #{custom-call.52} parent=38 // loop_header
                %s78 = sphi 0, %s82
                %p79 = scmp.ge.s32.totalorder %s78, 1
                %s83 = sphi %s56, %s56
                %s84 = sphi %s51, %s51
              $region42: #{custom-call.52} parent=38 // loop_header_branch
                %81 = sbr.rel (%p79) target = $region46
              $region43: #{custom-call.52} parent=38 // loop_body
                %v85 = vld [vmem:[%s83] sm:$0xf]
                %86 = vst [vmem:[%s84] sm:$0xf] %v85
              $region44: #{custom-call.52} parent=38 // loop_footer
                %s82 = sadd.s32 1, %s78
              $region45: #{custom-call.52} parent=38 // loop_footer_branch
                %77 = sbr.rel target = $region41
              $region46: #{custom-call.52} parent=38 // loop_exit
                _
            $region39: #{custom-call.52} parent=23 // pred_fallthru
              _
          $region24: #{custom-call.52} parent=19 // pred_fallthru
            _
          // Predicated region
          $region25: #{custom-call.52} parent=19 // pred_check
            _
          $region26: #{custom-call.52} parent=19 // pred_check_branch
            %62 = sbr.rel (0) target = $region28
          $region27: #{custom-call.52} parent=19 // pred_region
            loop: start=0, step=1, limit=1
            $region29: #{custom-call.52} parent=27 // loop_pre_header
              _
            $region30: #{custom-call.52} parent=27 // loop_header
              %s65 = sphi 0, %s69
              %p66 = scmp.ge.s32.totalorder %s65, 1
              %s70 = sphi %s56, %s56
              %s71 = sphi %s51, %s51
            $region31: #{custom-call.52} parent=27 // loop_header_branch
              %68 = sbr.rel (%p66) target = $region35
            $region32: #{custom-call.52} parent=27 // loop_body
              %v72 = vld [vmem:[%s70] sm:$0xf]
              %73 = vst [vmem:[%s71] sm:$0xf] %v72
            $region33: #{custom-call.52} parent=27 // loop_footer
              %s69 = sadd.s32 1, %s65
            $region34: #{custom-call.52} parent=27 // loop_footer_branch
              %64 = sbr.rel target = $region30
            $region35: #{custom-call.52} parent=27 // loop_exit
              _
          $region28: #{custom-call.52} parent=19 // pred_fallthru
            _
        $region20: #{custom-call.52} parent=15 // pred_fallthru
          _
        %87 = vnop
      $region16: #{custom-call.52} parent=5 // pred_fallthru
        _
      %p88 = scmp.le.s32.totalorder 1, %s3
      %p89 = scmp.lt.s32.totalorder %s3, 3
      %p90 = pnand %p88, %p89
      %p91 = pneg %p90
      // Predicated region
      $region47: #{custom-call.52} parent=5 // pred_check
        _
      $region48: #{custom-call.52} parent=5 // pred_check_branch
        %93 = sbr.rel (%p90) target = $region50
      $region49: #{custom-call.52} parent=5 // pred_region
        #allocation4 [shape = 'f32[4,4]{1,0}', space=vmem, size = 0x1000, scoped, tag = 'rescaled input a']
        %s94 = ssub.s32 %s3, 1
        %s95 = sand.u32 %s8, 1
        %s96 = sand.u32 %s8, 1
        %s97 = smul.addr %s96, 4
        %s98 = scalar_lea.vmem [#allocation1], %s97
        %s99 = sand.u32 %s8, 1
        %s100 = sand.u32 %s8, 1
        %s101 = smul.addr %s100, 4
        %s102 = scalar_lea.vmem [#allocation1], %s101
        %s103 = sand.u32 %s8, 1
        %s104 = sand.u32 %s8, 1
        %s105 = smul.addr %s104, 4
        %s106 = scalar_lea.vmem [#allocation3], %s105
        %s108 = sshllo.u32 0, 4
        %v109 = vld [vmem:[%s102] sm:%s108]
        %110 = vst [vmem:[#allocation0] sm:%s108] %v109
        %v111 = vlaneseq
        %v112 = vand.u32 %v111, 127
        %vm113 = vcmp.lt.s32.totalorder %v112, 4
        %v114 = vlaneseq
        %v115 = vshrl.u32 %v114, 7
        %vm117 = vcmp.eq.s32.totalorder %v115, %v112
        %v118 = vld [vmem:[#allocation0] sm:$0xff]
        %v119 = vsel %vm117, %v118, 0.0
        %120 = vadd.xlane.f32.xlu0 %v119
        %v121 = vpop.xlane.xlu0 %120
        %vm122 = vcmp.le.s32.totalorder %v115, %v112
        %vm123 = vmand %vm122, %vm113
        %v124 = vsel %vm123, %v118, 0.0
        %v125 = vrcp.pop %v121
        %v126 = vmul.f32 %v124, %v125
        %127 = vst [vmem:[#allocation4] sm:$0xff] %v126
        %v128 = vlaneseq
        %v129 = vand.u32 %v128, 127
        %v130 = vlaneseq
        %v131 = vshrl.u32 %v130, 7
        %vm133 = vcmp.eq.s32.totalorder %v129, %v131
        %v134 = vlaneseq
        %v135 = vand.u32 %v134, 127
        %vm136 = vcmp.eq.s32.totalorder %v135, 3
        %v137 = vsel %vm136, 1.0, -1.0
        %v138 = vsel %vm133, %v137, 0.0
        %s139 = scalar_lea.vmem [#allocation4], 2
        %v140 = vld [vmem:[%s139] ss:$0 sm:$0xff]
        %v141 = vxor.u32 %v140, 2147483648
        %v142 = vlaneseq
        %v143 = vand.u32 %v142, 127
        %vm144 = vcmp.eq.s32.totalorder %v143, 2
        %v145 = vmul.f32 %v141, %v138
        %146 = vadd.xlane.f32.xlu0 %v145
        %v147 = vpop.xlane.xlu0 %146
        %v148 = vsel %vm144, %v147, %v138
        %s149 = scalar_lea.vmem [#allocation4], 1
        %v150 = vld [vmem:[%s149] ss:$0 sm:$0xff]
        %v151 = vxor.u32 %v150, 2147483648
        %v152 = vlaneseq
        %v153 = vand.u32 %v152, 127
        %vm154 = vcmp.eq.s32.totalorder %v153, 1
        %v155 = vmul.f32 %v151, %v148
        %156 = vadd.xlane.f32.xlu0 %v155
        %v157 = vpop.xlane.xlu0 %156
        %v158 = vsel %vm154, %v157, %v148
        %v159 = vld [vmem:[#allocation4] ss:$0 sm:$0xff]
        %v160 = vxor.u32 %v159, 2147483648
        %v161 = vlaneseq
        %v162 = vand.u32 %v161, 127
        %vm163 = vcmp.eq.s32.totalorder %v162, 0
        %v164 = vmul.f32 %v160, %v158
        %165 = vadd.xlane.f32.xlu0 %v164
        %v166 = vpop.xlane.xlu0 %165
        %v167 = vsel %vm163, %v166, %v158
        %v168 = vrcp.pop %v121
        %v169 = vmul.f32 %v167, %v168
        %vm170 = vweird.f32 %v121
        %v171 = vsel %vm170, %v167, %v169
        %172 = vst [vmem:[#allocation2] sm:$0xff] %v171
        %s174 = sshllo.u32 0, 4
        %v176 = vld [vmem:[#allocation2] sm:%s174]
        %s177 = sshllo.u32 0, 4
        %178 = vst [vmem:[%s106] sm:%s177] %v176
        %s179 = sand.u32 %s8, 1
        %s180 = sand.u32 %s8, 1
        %s181 = smul.addr %s180, 4
        %s182 = scalar_lea.vmem [#allocation3], %s181
        %s183 = sadd.s32 %s17, %s16
        %s184 = sadd.s32 %s183, %s15
        %s185 = sadd.s32 %s184, %s14
        %s186 = smul.addr %s185, 4
        %s187 = scalar_lea.vmem %s1, %s186
        // Predicated region
        $region51: #{custom-call.52} parent=49 // pred_check
          _
        $region52: #{custom-call.52} parent=49 // pred_check_branch
          %189 = sbr.rel (0) target = $region54
        $region53: #{custom-call.52} parent=49 // pred_region
          // Predicated region
          $region55: #{custom-call.52} parent=53 // pred_check
            _
          $region56: #{custom-call.52} parent=53 // pred_check_branch
            %191 = sbr.rel target = $region58
          $region57: #{custom-call.52} parent=53 // pred_region
            // Predicated region
            $region70: #{custom-call.52} parent=57 // pred_check
              _
            $region71: #{custom-call.52} parent=57 // pred_check_branch
              %206 = sbr.rel (0) target = $region73
            $region72: #{custom-call.52} parent=57 // pred_region
              loop: start=0, step=1, limit=1
              $region74: #{custom-call.52} parent=72 // loop_pre_header
                _
              $region75: #{custom-call.52} parent=72 // loop_header
                %s209 = sphi 0, %s213
                %p210 = scmp.ge.s32.totalorder %s209, 1
                %s214 = sphi %s182, %s182
                %s215 = sphi %s187, %s187
              $region76: #{custom-call.52} parent=72 // loop_header_branch
                %212 = sbr.rel (%p210) target = $region80
              $region77: #{custom-call.52} parent=72 // loop_body
                %v216 = vld [vmem:[%s214] sm:$0xf]
                %217 = vst [vmem:[%s215] sm:$0xf] %v216
              $region78: #{custom-call.52} parent=72 // loop_footer
                %s213 = sadd.s32 1, %s209
              $region79: #{custom-call.52} parent=72 // loop_footer_branch
                %208 = sbr.rel target = $region75
              $region80: #{custom-call.52} parent=72 // loop_exit
                _
            $region73: #{custom-call.52} parent=57 // pred_fallthru
              _
          $region58: #{custom-call.52} parent=53 // pred_fallthru
            _
          // Predicated region
          $region59: #{custom-call.52} parent=53 // pred_check
            _
          $region60: #{custom-call.52} parent=53 // pred_check_branch
            %193 = sbr.rel (0) target = $region62
          $region61: #{custom-call.52} parent=53 // pred_region
            loop: start=0, step=1, limit=1
            $region63: #{custom-call.52} parent=61 // loop_pre_header
              _
            $region64: #{custom-call.52} parent=61 // loop_header
              %s196 = sphi 0, %s200
              %p197 = scmp.ge.s32.totalorder %s196, 1
              %s201 = sphi %s182, %s182
              %s202 = sphi %s187, %s187
            $region65: #{custom-call.52} parent=61 // loop_header_branch
              %199 = sbr.rel (%p197) target = $region69
            $region66: #{custom-call.52} parent=61 // loop_body
              %v203 = vld [vmem:[%s201] sm:$0xf]
              %204 = vst [vmem:[%s202] sm:$0xf] %v203
            $region67: #{custom-call.52} parent=61 // loop_footer
              %s200 = sadd.s32 1, %s196
            $region68: #{custom-call.52} parent=61 // loop_footer_branch
              %195 = sbr.rel target = $region64
            $region69: #{custom-call.52} parent=61 // loop_exit
              _
          $region62: #{custom-call.52} parent=53 // pred_fallthru
            _
        $region54: #{custom-call.52} parent=49 // pred_fallthru
          _
        %218 = vnop
      $region50: #{custom-call.52} parent=5 // pred_fallthru
        _
      %p219 = scmp.le.s32.totalorder 2, %s3
      // Predicated region
      $region81: #{custom-call.52} parent=5 // pred_check
        %p220 = pneg %p219
      $region82: #{custom-call.52} parent=5 // pred_check_branch
        %222 = sbr.rel (%p220) target = $region84
      $region83: #{custom-call.52} parent=5 // pred_region
        %s223 = ssub.s32 %s3, 2
        %s224 = sand.u32 %s9, 1
        %s225 = sand.u32 %s9, 1
        %s226 = smul.addr %s225, 4
        %s227 = scalar_lea.vmem [#allocation3], %s226
      $region84: #{custom-call.52} parent=5 // pred_fallthru
        _
    $region6: #{custom-call.52} parent=1 // loop_footer
      %s7 = sadd.s32 1, %s3
    $region7: #{custom-call.52} parent=1 // loop_footer_branch
      %2 = sbr.rel target = $region3
    $region8: #{custom-call.52} parent=1 // loop_exit
      _

// kernel: _forward_impl.1
$region0: #{_forward_impl.1}
  #allocation0 [shape = 'u32[]', space=smem, size = 0x4, offset = 0x4, fixed_abs, tag = 'smem constant byte address 0x4 - core index']
  #allocation1 [shape = 'u32[144,128]{1,0:T(1,128)}', space=vmem, size = 0x12000, scoped, tag = 'internal scratch']
  %s0 = inlined_call_operand.vmem [shape: bf16[10,18,64], index: 0, kind: input, shape index: {}]
  %s1 = inlined_call_operand.vmem [shape: bf16[10,32,64], index: 1, kind: input, shape index: {}]
  %s2 = inlined_call_operand.vmem [shape: f32[48,18], index: 2, kind: input, shape index: {}]
  %s3 = inlined_call_operand.vmem [shape: f32[48,1], index: 3, kind: input, shape index: {}]
  %s4 = inlined_call_operand.vmem [shape: bf16[10,32,64], index: 4, kind: output, shape index: {0}]
  %s5 = inlined_call_operand.vmem [shape: bf16[10,16,64], index: 5, kind: output, shape index: {1}]
  %6 = xla_tuple %s4, %s5
  %s7 = sld [smem:[#allocation0]]
  $region57: #{_forward_impl.1} parent=0
    _
  %s9 = ssub.s32 1, %s7
  %s10 = scalar_select 0, %s9, %s7
  loop: start=0, step=1, limit=4
  $region2: #{_forward_impl.1} parent=0 // loop_pre_header
    _
  $region3: #{_forward_impl.1} parent=0 // loop_header
    %s12 = sphi 0, %s16
    %p13 = scmp.ge.s32.totalorder %s12, 4
    %s19 = sphi 0, %s31
    %s20 = sphi 0, %s27
    %s21 = sphi 0, %s19
    %s22 = sphi 0, %s20
    %s23 = sphi 0, %s21
    %s24 = sphi 0, %s22
    %s36 = sphi 0, %s38
    %s39 = sphi 0, %s36
    %s40 = sphi 0, %s39
    %s56 = sphi 0, %s40
    %s64 = sphi 0, %s66
    %s67 = sphi 0, %s64
    %s68 = sphi 0, %s67
    %s84 = sphi 0, %s68
    %s88 = sphi 0, %s88
    %s90 = sphi 0, %s88
    %s91 = sphi 0, %s90
    %s105 = sphi 0, %s91
    %s109 = sphi 0, %s109
    %s111 = sphi 0, %s109
    %s112 = sphi 0, %s111
    %s126 = sphi 0, %s112
    %s134 = sphi 0, %s136
    %s137 = sphi 0, %s134
    %s138 = sphi 0, %s137
    %s154 = sphi 0, %s138
    %s162 = sphi 0, %s164
    %s165 = sphi 0, %s162
    %s166 = sphi 0, %s165
    %s182 = sphi 0, %s166
  $region4: #{_forward_impl.1} parent=0 // loop_header_branch
    %15 = sbr.rel (%p13) target = $region8
  $region5: #{_forward_impl.1} parent=0 // loop_body
    %s17 = ssub.s32 %s12, 1
    %s18 = ssub.s32 %s12, 2
    %s25 = sadd.s32 1, %s20
    %p26 = scmp.ge.s32.totalorder %s25, 1
    %s27 = scalar_select %p26, 0, %s25
    %s28 = sadd.s32 1, %s19
    %s29 = scalar_select %p26, %s28, %s19
    %p30 = scmp.ge.s32.totalorder %s29, 2
    %s31 = scalar_select %p30, 0, %s29
    %s32 = ssub.s32 %s19, %s31
    %s33 = ssub.s32 %s20, %s27
    %s34 = sor.u32 %s32, %s33
    %p35 = scmp.eq.s32.totalorder %s34, 0
    %s37 = sadd.s32 %s36, 1
    %s38 = scalar_select %p35, %s36, %s37
    %p41 = pneg %p35
    %p42 = scmp.eq.s32.totalorder %s12, 1
    %p43 = por %p41, %p42
    %p44 = scmp.ne.s32.totalorder %s36, %s39
    %p45 = scmp.eq.s32.totalorder %s12, 0
    %p46 = por %p44, %p45
    %p47 = scmp.ne.s32.totalorder %s36, %s39
    %p48 = scmp.eq.s32.totalorder %s17, 1
    %p49 = por %p47, %p48
    %p50 = scmp.ne.s32.totalorder %s39, %s40
    %p51 = scmp.eq.s32.totalorder %s17, 0
    %p52 = por %p50, %p51
    %p53 = scmp.ne.s32.totalorder %s39, %s40
    %p54 = scmp.eq.s32.totalorder %s18, 1
    %p55 = por %p53, %p54
    %p57 = scmp.ne.s32.totalorder %s40, %s56
    %p58 = scmp.eq.s32.totalorder %s18, 0
    %p59 = por %p57, %p58
    %s60 = ssub.s32 %s19, %s31
    %s61 = ssub.s32 %s20, %s27
    %s62 = sor.u32 %s60, %s61
    %p63 = scmp.eq.s32.totalorder %s62, 0
    %s65 = sadd.s32 %s64, 1
    %s66 = scalar_select %p63, %s64, %s65
    %p69 = pneg %p63
    %p70 = scmp.eq.s32.totalorder %s12, 1
    %p71 = por %p69, %p70
    %p72 = scmp.ne.s32.totalorder %s64, %s67
    %p73 = scmp.eq.s32.totalorder %s12, 0
    %p74 = por %p72, %p73
    %p75 = scmp.ne.s32.totalorder %s64, %s67
    %p76 = scmp.eq.s32.totalorder %s17, 1
    %p77 = por %p75, %p76
    %p78 = scmp.ne.s32.totalorder %s67, %s68
    %p79 = scmp.eq.s32.totalorder %s17, 0
    %p80 = por %p78, %p79
    %p81 = scmp.ne.s32.totalorder %s67, %s68
    %p82 = scmp.eq.s32.totalorder %s18, 1
    %p83 = por %p81, %p82
    %p85 = scmp.ne.s32.totalorder %s68, %s84
    %p86 = scmp.eq.s32.totalorder %s18, 0
    %p87 = por %p85, %p86
    %s89 = sadd.s32 %s88, 1
    %p92 = scmp.eq.s32.totalorder %s12, 1
    %p93 = scmp.ne.s32.totalorder %s88, %s90
    %p94 = scmp.eq.s32.totalorder %s12, 0
    %p95 = por %p93, %p94
    %p96 = scmp.ne.s32.totalorder %s88, %s90
    %p97 = scmp.eq.s32.totalorder %s17, 1
    %p98 = por %p96, %p97
    %p99 = scmp.ne.s32.totalorder %s90, %s91
    %p100 = scmp.eq.s32.totalorder %s17, 0
    %p101 = por %p99, %p100
    %p102 = scmp.ne.s32.totalorder %s90, %s91
    %p103 = scmp.eq.s32.totalorder %s18, 1
    %p104 = por %p102, %p103
    %p106 = scmp.ne.s32.totalorder %s91, %s105
    %p107 = scmp.eq.s32.totalorder %s18, 0
    %p108 = por %p106, %p107
    %s110 = sadd.s32 %s109, 1
    %p113 = scmp.eq.s32.totalorder %s12, 1
    %p114 = scmp.ne.s32.totalorder %s109, %s111
    %p115 = scmp.eq.s32.totalorder %s12, 0
    %p116 = por %p114, %p115
    %p117 = scmp.ne.s32.totalorder %s109, %s111
    %p118 = scmp.eq.s32.totalorder %s17, 1
    %p119 = por %p117, %p118
    %p120 = scmp.ne.s32.totalorder %s111, %s112
    %p121 = scmp.eq.s32.totalorder %s17, 0
    %p122 = por %p120, %p121
    %p123 = scmp.ne.s32.totalorder %s111, %s112
    %p124 = scmp.eq.s32.totalorder %s18, 1
    %p125 = por %p123, %p124
    %p127 = scmp.ne.s32.totalorder %s112, %s126
    %p128 = scmp.eq.s32.totalorder %s18, 0
    %p129 = por %p127, %p128
    %s130 = ssub.s32 %s19, %s31
    %s131 = ssub.s32 %s20, %s27
    %s132 = sor.u32 %s130, %s131
    %p133 = scmp.eq.s32.totalorder %s132, 0
    %s135 = sadd.s32 %s134, 1
    %s136 = scalar_select %p133, %s134, %s135
    %p139 = pneg %p133
    %p140 = scmp.eq.s32.totalorder %s12, 1
    %p141 = por %p139, %p140
    %p142 = scmp.ne.s32.totalorder %s134, %s137
    %p143 = scmp.eq.s32.totalorder %s12, 0
    %p144 = por %p142, %p143
    %p145 = scmp.ne.s32.totalorder %s134, %s137
    %p146 = scmp.eq.s32.totalorder %s17, 1
    %p147 = por %p145, %p146
    %p148 = scmp.ne.s32.totalorder %s137, %s138
    %p149 = scmp.eq.s32.totalorder %s17, 0
    %p150 = por %p148, %p149
    %p151 = scmp.ne.s32.totalorder %s137, %s138
    %p152 = scmp.eq.s32.totalorder %s18, 1
    %p153 = por %p151, %p152
    %p155 = scmp.ne.s32.totalorder %s138, %s154
    %p156 = scmp.eq.s32.totalorder %s18, 0
    %p157 = por %p155, %p156
    %s158 = ssub.s32 %s19, %s31
    %s159 = ssub.s32 %s20, %s27
    %s160 = sor.u32 %s158, %s159
    %p161 = scmp.eq.s32.totalorder %s160, 0
    %s163 = sadd.s32 %s162, 1
    %s164 = scalar_select %p161, %s162, %s163
    %p167 = pneg %p161
    %p168 = scmp.eq.s32.totalorder %s12, 1
    %p169 = por %p167, %p168
    %p170 = scmp.ne.s32.totalorder %s162, %s165
    %p171 = scmp.eq.s32.totalorder %s12, 0
    %p172 = por %p170, %p171
    %p173 = scmp.ne.s32.totalorder %s162, %s165
    %p174 = scmp.eq.s32.totalorder %s17, 1
    %p175 = por %p173, %p174
    %p176 = scmp.ne.s32.totalorder %s165, %s166
    %p177 = scmp.eq.s32.totalorder %s17, 0
    %p178 = por %p176, %p177
    %p179 = scmp.ne.s32.totalorder %s165, %s166
    %p180 = scmp.eq.s32.totalorder %s18, 1
    %p181 = por %p179, %p180
    %p183 = scmp.ne.s32.totalorder %s166, %s182
    %p184 = scmp.eq.s32.totalorder %s18, 0
    %p185 = por %p183, %p184
    %p186 = scmp.le.s32.totalorder 1, %s12
    %p187 = scmp.lt.s32.totalorder %s12, 3
    %p188 = pnand %p186, %p187
    %p189 = pneg %p188
    // Predicated region
    $region9: #{_forward_impl.1} parent=5 // pred_check
      _
    $region10: #{_forward_impl.1} parent=5 // pred_check_branch
      %191 = sbr.rel (%p188) target = $region12
    $region11: #{_forward_impl.1} parent=5 // pred_region
      %s192 = ssub.s32 %s12, 1
      // Predicated region
      $region13: #{_forward_impl.1} parent=11 // pred_check
        %p193 = pneg %p101
      $region14: #{_forward_impl.1} parent=11 // pred_check_branch
        %195 = sbr.rel (%p193) target = $region16
      $region15: #{_forward_impl.1} parent=11 // pred_region
        _
      $region16: #{_forward_impl.1} parent=11 // pred_fallthru
        _
      // Predicated region
      $region17: #{_forward_impl.1} parent=11 // pred_check
        %p196 = pneg %p122
      $region18: #{_forward_impl.1} parent=11 // pred_check_branch
        %198 = sbr.rel (%p196) target = $region20
      $region19: #{_forward_impl.1} parent=11 // pred_region
        _
      $region20: #{_forward_impl.1} parent=11 // pred_fallthru
        _
    $region12: #{_forward_impl.1} parent=5 // pred_fallthru
      _
    %p199 = scmp.lt.s32.totalorder %s12, 2
    // Predicated region
    $region21: #{_forward_impl.1} parent=5 // pred_check
      %p200 = pneg %p199
    $region22: #{_forward_impl.1} parent=5 // pred_check_branch
      %202 = sbr.rel (%p200) target = $region24
    $region23: #{_forward_impl.1} parent=5 // pred_region
      // Predicated region
      $region25: #{_forward_impl.1} parent=23 // pred_check
        %p203 = pneg %p46
      $region26: #{_forward_impl.1} parent=23 // pred_check_branch
        %205 = sbr.rel (%p203) target = $region28
      $region27: #{_forward_impl.1} parent=23 // pred_region
        %s206 = smul.u32 5, %s19
        %p207 = scmp.lt.s32.totalorder %s206, 9
        %s208 = scalar_select %p207, %s206, 9
        %p209 = scmp.lt.s32.totalorder %s20, 0
        %s210 = scalar_select %p209, %s20, 0
        %s211 = smul.addr %s208, 3
        %s212 = sadd.s32 %s210, %s211
        %s213 = smul.addr %s212, 4
        %s214 = scalar_lea.vmem %s0, %s213
        %s215 = smul.u32 5, %s19
      $region28: #{_forward_impl.1} parent=23 // pred_fallthru
        _
      // Predicated region
      $region29: #{_forward_impl.1} parent=23 // pred_check
        %p216 = pneg %p74
      $region30: #{_forward_impl.1} parent=23 // pred_check_branch
        %218 = sbr.rel (%p216) target = $region32
      $region31: #{_forward_impl.1} parent=23 // pred_region
        %s219 = smul.u32 5, %s19
        %p220 = scmp.lt.s32.totalorder %s219, 9
        %s221 = scalar_select %p220, %s219, 9
        %p222 = scmp.lt.s32.totalorder %s20, 0
        %s223 = scalar_select %p222, %s20, 0
        %s224 = smul.addr %s221, 4
        %s225 = sadd.s32 %s223, %s224
        %s226 = smul.addr %s225, 4
        %s227 = scalar_lea.vmem %s1, %s226
        %s228 = smul.u32 5, %s19
      $region32: #{_forward_impl.1} parent=23 // pred_fallthru
        _
    $region24: #{_forward_impl.1} parent=5 // pred_fallthru
      _
    %p229 = scmp.le.s32.totalorder 1, %s12
    %p230 = scmp.lt.s32.totalorder %s12, 3
    %p231 = pnand %p229, %p230
    %p232 = pneg %p231
    // Predicated region
    $region33: #{_forward_impl.1} parent=5 // pred_check
      _
    $region34: #{_forward_impl.1} parent=5 // pred_check_branch
      %234 = sbr.rel (%p231) target = $region36
    $region35: #{_forward_impl.1} parent=5 // pred_region
      %s235 = ssub.s32 %s12, 1
      %s236 = smul.u32 5, %s21
      %p237 = scmp.lt.s32.totalorder %s236, 9
      %s238 = scalar_select %p237, %s236, 9
      %p239 = scmp.lt.s32.totalorder %s22, 0
      %s240 = scalar_select %p239, %s22, 0
      %s241 = smul.addr %s238, 3
      %s242 = sadd.s32 %s240, %s241
      %s243 = smul.addr %s242, 4
      %s244 = scalar_lea.vmem %s0, %s243
      %p245 = pneg %p52
      %p246 = pneg %p49
      %s247 = smul.u32 5, %s21
      %p248 = scmp.lt.s32.totalorder %s247, 9
      %s249 = scalar_select %p248, %s247, 9
      %p250 = scmp.lt.s32.totalorder %s22, 0
      %s251 = scalar_select %p250, %s22, 0
      %s252 = smul.addr %s249, 4
      %s253 = sadd.s32 %s251, %s252
      %s254 = smul.addr %s253, 4
      %s255 = scalar_lea.vmem %s1, %s254
      %p256 = pneg %p80
      %p257 = pneg %p77
      %p258 = pneg %p101
      %p259 = pneg %p98
      %p260 = pneg %p122
      %p261 = pneg %p119
      %p262 = pneg %p150
      %p263 = pneg %p147
      %s264 = smul.u32 5, %s21
      %p265 = scmp.lt.s32.totalorder %s264, 9
      %s266 = scalar_select %p265, %s264, 9
      %p267 = scmp.lt.s32.totalorder %s22, 0
      %s268 = scalar_select %p267, %s22, 0
      %s269 = smul.addr %s266, 4
      %s270 = sadd.s32 %s268, %s269
      %s271 = smul.addr %s270, 4
      %s272 = scalar_lea.vmem %s4, %s271
      %p273 = pneg %p178
      %p274 = pneg %p175
      %s275 = smul.u32 5, %s21
      %p276 = scmp.lt.s32.totalorder %s275, 9
      %s277 = scalar_select %p276, %s275, 9
      %p278 = scmp.lt.s32.totalorder %s22, 0
      %s279 = scalar_select %p278, %s22, 0
      %s280 = smul.addr %s277, 2
      %s281 = sadd.s32 %s279, %s280
      %s282 = smul.addr %s281, 4
      %s283 = scalar_lea.vmem %s5, %s282
      %s284 = smul.u32 5, %s21
      %p285 = scmp.lt.s32.totalorder %s284, 9
      %s286 = scalar_select %p285, %s284, 9
      %p287 = scmp.lt.s32.totalorder %s22, 0
      %s288 = scalar_select %p287, %s22, 0
      %s289 = smul.addr %s286, 3
      %s290 = sadd.s32 %s288, %s289
      %s291 = smul.addr %s290, 4
      %s292 = scalar_lea.vmem %s0, %s291
      %s293 = smul.u32 5, %s21
      %s294 = smul.u32 5, %s21
      %p295 = scmp.lt.s32.totalorder %s294, 9
      %s296 = scalar_select %p295, %s294, 9
      %p297 = scmp.lt.s32.totalorder %s22, 0
      %s298 = scalar_select %p297, %s22, 0
      %s299 = smul.addr %s296, 4
      %s300 = sadd.s32 %s298, %s299
      %s301 = smul.addr %s300, 4
      %s302 = scalar_lea.vmem %s1, %s301
      %s303 = smul.u32 5, %s21
      %s304 = smul.u32 5, %s21
      %p305 = scmp.lt.s32.totalorder %s304, 9
      %s306 = scalar_select %p305, %s304, 9
      %p307 = scmp.lt.s32.totalorder %s22, 0
      %s308 = scalar_select %p307, %s22, 0
      %s309 = smul.addr %s306, 4
      %s310 = sadd.s32 %s308, %s309
      %s311 = smul.addr %s310, 4
      %s312 = scalar_lea.vmem %s4, %s311
      %s313 = smul.u32 5, %s21
      %s314 = smul.u32 5, %s21
      %p315 = scmp.lt.s32.totalorder %s314, 9
      %s316 = scalar_select %p315, %s314, 9
      %p317 = scmp.lt.s32.totalorder %s22, 0
      %s318 = scalar_select %p317, %s22, 0
      %s319 = smul.addr %s316, 2
      %s320 = sadd.s32 %s318, %s319
      %s321 = smul.addr %s320, 4
      %s322 = scalar_lea.vmem %s5, %s321
      %s323 = smul.u32 5, %s21
      %v324 = vld [vmem:[%s2] sm:$0xff]
      %v325 = vld [vmem:[%s2 + $0x8] sm:$0xff]
      %v326 = vld [vmem:[%s2 + $0x10] sm:$0xff]
      %v327 = vld [vmem:[%s2 + $0x18] sm:$0xff]
      %v328 = vld [vmem:[%s2 + $0x20] sm:$0xff]
      %v329 = vld [vmem:[%s2 + $0x28] sm:$0xff]
      %v330 = vld [vmem:[%s3] sm:$0xff]
      %v331 = vld [vmem:[%s3 + $0x8] sm:$0xff]
      %v332 = vld [vmem:[%s3 + $0x10] sm:$0xff]
      %v333 = vld [vmem:[%s3 + $0x18] sm:$0xff]
      %v334 = vld [vmem:[%s3 + $0x20] sm:$0xff]
      %v335 = vld [vmem:[%s3 + $0x28] sm:$0xff]
      %v336 = vld [vmem:[%s292] sm:$0xf]
      %v337 = vld [vmem:[%s292 + $0x4] sm:$0xf]
      %v338 = vld [vmem:[%s292 + $0x8] sm:$0x1]
      %v339 = vunpack.c.l.bf16 %v336
      %v340 = vunpack.c.l.bf16 %v337
      %v341 = vunpack.c.l.bf16 %v338
      %343 = vset.pattern.permute.xlu0 0
      %344 = vperm.xlu0 %343, %v330
      %v345 = vpop.permute.xlu0 %344
      %348 = vset.pattern.permute.xlu0 0
      %349 = vperm.xlu0 %348, %v331
      %v350 = vpop.permute.xlu0 %349
      %353 = vset.pattern.permute.xlu0 0
      %354 = vperm.xlu0 %353, %v332
      %v355 = vpop.permute.xlu0 %354
      %358 = vset.pattern.permute.xlu0 0
      %359 = vperm.xlu0 %358, %v333
      %v360 = vpop.permute.xlu0 %359
      %363 = vset.pattern.permute.xlu0 0
      %364 = vperm.xlu0 %363, %v334
      %v365 = vpop.permute.xlu0 %364
      %368 = vset.pattern.permute.xlu0 0
      %369 = vperm.xlu0 %368, %v335
      %v370 = vpop.permute.xlu0 %369
      %vm372 = vcmask 146432
      %v374 = vsel %vm372, %v324, 0
      %v377 = vsel %vm372, %v325, 0
      %v380 = vsel %vm372, %v326, 0
      %v383 = vsel %vm372, %v327, 0
      %v386 = vsel %vm372, %v328, 0
      %v389 = vsel %vm372, %v329, 0
      %vm391 = vcmask 1041408
      %v393 = vsel %vm391, %v341, 0
      %395 = vmatprep.subr.mxu0 0.0
      %396 = vmatpush1.msra.mxu0 %v339
      %397 = vmatprep.subr.mxu0 0.0
      %398 = vmatpush1.msra.mxu0 %v340
      %399 = vmatprep.subr.mxu0 0.0
      %400 = vmatpush1.msra.mxu0 %v393
      %401 = vmatprep.subr.mxu0 0.0
      %402 = vmatpush1.msra.mxu0 0.0
      %403 = vmatprep.subr.mxu0 0.0
      %404 = vmatpush1.msra.mxu0 0.0
      %405 = vmatprep.subr.mxu0 0.0
      %406 = vmatpush1.msra.mxu0 0.0
      %407 = vmatprep.subr.mxu0 0.0
      %408 = vmatpush1.msra.mxu0 0.0
      %409 = vmatprep.subr.mxu0 0.0
      %410 = vmatpush1.msra.mxu0 0.0
      %411 = vmatprep.subr.mxu0 0.0
      %412 = vmatpush1.msra.mxu0 0.0
      %413 = vmatprep.subr.mxu0 0.0
      %414 = vmatpush1.msra.mxu0 0.0
      %415 = vmatprep.subr.mxu0 0.0
      %416 = vmatpush1.msra.mxu0 0.0
      %417 = vmatprep.subr.mxu0 0.0
      %418 = vmatpush1.msra.mxu0 0.0
      %419 = vmatprep.subr.mxu0 0.0
      %420 = vmatpush1.msra.mxu0 0.0
      %421 = vmatprep.subr.mxu0 0.0
      %422 = vmatpush1.msra.mxu0 0.0
      %423 = vmatprep.subr.mxu0 0.0
      %424 = vmatpush1.msra.mxu0 0.0
      %425 = vmatprep.subr.mxu0 0.0
      %426 = vmatpush1.msra.mxu0 0.0
      %427 = vmatprep.subr.mxu0 0.0
      %428 = vmatpush1.msra.mxu0 0.0
      %429 = vmatprep.subr.mxu0 0.0
      %430 = vmatpush1.msra.mxu0 0.0
      %431 = vmatprep.subr.mxu0 0.0
      %432 = vmatpush1.msra.mxu0 0.0
      %433 = vmatprep.subr.mxu0 0.0
      %434 = vmatpush1.msra.mxu0 0.0
      %435 = vmatprep.subr.mxu0 0.0
      %436 = vmatpush1.msra.mxu0 0.0
      %437 = vmatprep.subr.mxu0 0.0
      %438 = vmatpush1.msra.mxu0 0.0
      %439 = vmatprep.subr.mxu0 0.0
      %440 = vmatpush1.msra.mxu0 0.0
      %441 = vmatprep.subr.mxu0 0.0
      %442 = vmatpush1.msra.mxu0 0.0
      %443 = vmatprep.subr.mxu0 0.0
      %444 = vmatpush1.msra.mxu0 0.0
      %445 = vmatprep.subr.mxu0 0.0
      %446 = vmatpush1.msra.mxu0 0.0
      %447 = vmatprep.subr.mxu0 0.0
      %448 = vmatpush1.msra.mxu0 0.0
      %449 = vmatprep.subr.mxu0 0.0
      %450 = vmatpush1.msra.mxu0 0.0
      %451 = vmatprep.subr.mxu0 0.0
      %452 = vmatpush1.msra.mxu0 0.0
      %453 = vmatprep.subr.mxu0 0.0
      %454 = vmatpush1.msra.mxu0 0.0
      %455 = vmatprep.subr.mxu0 0.0
      %456 = vmatpush1.msra.mxu0 0.0
      %457 = vmatprep.subr.mxu0 0.0
      %458 = vmatpush1.msra.mxu0 0.0
      %459 = vmatprep.mubr.f32.mxu0 0.0
      %460 = vmatmul.mubr.f32.gmra.mrb[0].mxu0 %v374
      %v461 = vpop.f32.mrb[0].mxu0
      %v462 = vadd.f32 %v345, %v461
      %v463 = vpop.f32.mrb[0].mxu0
      %464 = vmatprep.mubr.f32.mxu0 0.0
      %465 = vmatmul.mubr.f32.gmra.mrb[0].mxu0 %v377
      %v466 = vpop.f32.mrb[0].mxu0
      %v467 = vadd.f32 %v350, %v466
      %v468 = vpop.f32.mrb[0].mxu0
      %469 = vmatprep.mubr.f32.mxu0 0.0
      %470 = vmatmul.mubr.f32.gmra.mrb[0].mxu0 %v380
      %v471 = vpop.f32.mrb[0].mxu0
      %v472 = vadd.f32 %v355, %v471
      %v473 = vpop.f32.mrb[0].mxu0
      %474 = vmatprep.mubr.f32.mxu0 0.0
      %475 = vmatmul.mubr.f32.gmra.mrb[0].mxu0 %v383
      %v476 = vpop.f32.mrb[0].mxu0
      %v477 = vadd.f32 %v360, %v476
      %v478 = vpop.f32.mrb[0].mxu0
      %479 = vmatprep.mubr.f32.mxu0 0.0
      %480 = vmatmul.mubr.f32.gmra.mrb[0].mxu0 %v386
      %v481 = vpop.f32.mrb[0].mxu0
      %v482 = vadd.f32 %v365, %v481
      %v483 = vpop.f32.mrb[0].mxu0
      %484 = vmatprep.mubr.f32.mxu0 0.0
      %485 = vmatmul.mubr.f32.gmra.mrb[0].mxu0 %v389
      %v486 = vpop.f32.mrb[0].mxu0
      %v487 = vadd.f32 %v370, %v486
      %v488 = vpop.f32.mrb[0].mxu0
      %489 = vdwg.mxu0
      %v490 = vld [vmem:[%s302] sm:$0xf]
      %v491 = vld [vmem:[%s302 + $0x4] sm:$0xf]
      %v492 = vld [vmem:[%s302 + $0x8] sm:$0xf]
      %v493 = vld [vmem:[%s302 + $0xc] sm:$0xf]
      %v494 = vunpack.c.l.bf16 %v490
      %v495 = vunpack.c.l.bf16 %v491
      %v496 = vunpack.c.l.bf16 %v492
      %v497 = vunpack.c.l.bf16 %v493
      %v498 = vadd.f32 %v494, %v462
      %v499 = vadd.f32 %v495, %v467
      %v500 = vadd.f32 %v496, %v472
      %v501 = vadd.f32 %v497, %v477
      %v502 = vpack.c.bf16 %v499, %v498
      %v503 = vpack.c.bf16 %v501, %v500
      %v506 = vunpack.c.l.b16 %v502
      %v507 = vunpack.c.h.b16 %v502
      %v508 = vunpack.c.l.b16 %v503
      %v509 = vunpack.c.h.b16 %v503
      %v510 = vpack.c.b16 %v506, %v506
      %v511 = vpack.c.b16 %v507, %v507
      %v512 = vpack.c.b16 %v508, %v508
      %v513 = vpack.c.b16 %v509, %v509
      %vm518 = vcmask 519168
      %519 = vst.msk [vmem:[%s312] sm:$0xf] %vm518, %v510
      %520 = vst.msk [vmem:[%s312 + $0x4] sm:$0xf] %vm518, %v511
      %521 = vst.msk [vmem:[%s312 + $0x8] sm:$0xf] %vm518, %v512
      %522 = vst.msk [vmem:[%s312 + $0xc] sm:$0xf] %vm518, %v513
      %v523 = vpack.c.bf16 %v487, %v482
      %v525 = vunpack.c.l.b16 %v523
      %v526 = vunpack.c.h.b16 %v523
      %v527 = vpack.c.b16 %v525, %v525
      %v528 = vpack.c.b16 %v526, %v526
      %531 = vst.msk [vmem:[%s322] sm:$0xf] %vm518, %v527
      %532 = vst.msk [vmem:[%s322 + $0x4] sm:$0xf] %vm518, %v528
      %s533 = scalar_lea.vmem %s292, 12
      %v534 = vld [vmem:[%s533] sm:$0xf]
      %v535 = vld [vmem:[%s533 + $0x4] sm:$0xf]
      %v536 = vld [vmem:[%s533 + $0x8] sm:$0x1]
      %v537 = vunpack.c.l.bf16 %v534
      %v538 = vunpack.c.l.bf16 %v535
      %v539 = vunpack.c.l.bf16 %v536
      %v541 = vsel %vm391, %v539, 0
      %543 = vmatprep.subr.mxu0 0.0
      %544 = vmatpush1.msra.mxu0 %v537
      %545 = vmatprep.subr.mxu0 0.0
      %546 = vmatpush1.msra.mxu0 %v538
      %547 = vmatprep.subr.mxu0 0.0
      %548 = vmatpush1.msra.mxu0 %v541
      %549 = vmatprep.subr.mxu0 0.0
      %550 = vmatpush1.msra.mxu0 0.0
      %551 = vmatprep.subr.mxu0 0.0
      %552 = vmatpush1.msra.mxu0 0.0
      %553 = vmatprep.subr.mxu0 0.0
      %554 = vmatpush1.msra.mxu0 0.0
      %555 = vmatprep.subr.mxu0 0.0
      %556 = vmatpush1.msra.mxu0 0.0
      %557 = vmatprep.subr.mxu0 0.0
      %558 = vmatpush1.msra.mxu0 0.0
      %559 = vmatprep.subr.mxu0 0.0
      %560 = vmatpush1.msra.mxu0 0.0
      %561 = vmatprep.subr.mxu0 0.0
      %562 = vmatpush1.msra.mxu0 0.0
      %563 = vmatprep.subr.mxu0 0.0
      %564 = vmatpush1.msra.mxu0 0.0
      %565 = vmatprep.subr.mxu0 0.0
      %566 = vmatpush1.msra.mxu0 0.0
      %567 = vmatprep.subr.mxu0 0.0
      %568 = vmatpush1.msra.mxu0 0.0
      %569 = vmatprep.subr.mxu0 0.0
      %570 = vmatpush1.msra.mxu0 0.0
      %571 = vmatprep.subr.mxu0 0.0
      %572 = vmatpush1.msra.mxu0 0.0
      %573 = vmatprep.subr.mxu0 0.0
      %574 = vmatpush1.msra.mxu0 0.0
      %575 = vmatprep.subr.mxu0 0.0
      %576 = vmatpush1.msra.mxu0 0.0
      %577 = vmatprep.subr.mxu0 0.0
      %578 = vmatpush1.msra.mxu0 0.0
      %579 = vmatprep.subr.mxu0 0.0
      %580 = vmatpush1.msra.mxu0 0.0
      %581 = vmatprep.subr.mxu0 0.0
      %582 = vmatpush1.msra.mxu0 0.0
      %583 = vmatprep.subr.mxu0 0.0
      %584 = vmatpush1.msra.mxu0 0.0
      %585 = vmatprep.subr.mxu0 0.0
      %586 = vmatpush1.msra.mxu0 0.0
      %587 = vmatprep.subr.mxu0 0.0
      %588 = vmatpush1.msra.mxu0 0.0
      %589 = vmatprep.subr.mxu0 0.0
      %590 = vmatpush1.msra.mxu0 0.0
      %591 = vmatprep.subr.mxu0 0.0
      %592 = vmatpush1.msra.mxu0 0.0
      %593 = vmatprep.subr.mxu0 0.0
      %594 = vmatpush1.msra.mxu0 0.0
      %595 = vmatprep.subr.mxu0 0.0
      %596 = vmatpush1.msra.mxu0 0.0
      %597 = vmatprep.subr.mxu0 0.0
      %598 = vmatpush1.msra.mxu0 0.0
      %599 = vmatprep.subr.mxu0 0.0
      %600 = vmatpush1.msra.mxu0 0.0
      %601 = vmatprep.subr.mxu0 0.0
      %602 = vmatpush1.msra.mxu0 0.0
      %603 = vmatprep.subr.mxu0 0.0
      %604 = vmatpush1.msra.mxu0 0.0
      %605 = vmatprep.subr.mxu0 0.0
      %606 = vmatpush1.msra.mxu0 0.0
      %607 = vmatprep.mubr.f32.mxu0 0.0
      %608 = vmatmul.mubr.f32.gmra.mrb[0].mxu0 %v374
      %v609 = vpop.f32.mrb[0].mxu0
      %v610 = vadd.f32 %v345, %v609
      %v611 = vpop.f32.mrb[0].mxu0
      %612 = vmatprep.mubr.f32.mxu0 0.0
      %613 = vmatmul.mubr.f32.gmra.mrb[0].mxu0 %v377
      %v614 = vpop.f32.mrb[0].mxu0
      %v615 = vadd.f32 %v350, %v614
      %v616 = vpop.f32.mrb[0].mxu0
      %617 = vmatprep.mubr.f32.mxu0 0.0
      %618 = vmatmul.mubr.f32.gmra.mrb[0].mxu0 %v380
      %v619 = vpop.f32.mrb[0].mxu0
      %v620 = vadd.f32 %v355, %v619
      %v621 = vpop.f32.mrb[0].mxu0
      %622 = vmatprep.mubr.f32.mxu0 0.0
      %623 = vmatmul.mubr.f32.gmra.mrb[0].mxu0 %v383
      %v624 = vpop.f32.mrb[0].mxu0
      %v625 = vadd.f32 %v360, %v624
      %v626 = vpop.f32.mrb[0].mxu0
      %627 = vmatprep.mubr.f32.mxu0 0.0
      %628 = vmatmul.mubr.f32.gmra.mrb[0].mxu0 %v386
      %v629 = vpop.f32.mrb[0].mxu0
      %v630 = vadd.f32 %v365, %v629
      %v631 = vpop.f32.mrb[0].mxu0
      %632 = vmatprep.mubr.f32.mxu0 0.0
      %633 = vmatmul.mubr.f32.gmra.mrb[0].mxu0 %v389
      %v634 = vpop.f32.mrb[0].mxu0
      %v635 = vadd.f32 %v370, %v634
      %v636 = vpop.f32.mrb[0].mxu0
      %637 = vdwg.mxu0
      %s638 = scalar_lea.vmem %s302, 16
      %v639 = vld [vmem:[%s638] sm:$0xf]
      %v640 = vld [vmem:[%s638 + $0x4] sm:$0xf]
      %v641 = vld [vmem:[%s638 + $0x8] sm:$0xf]
      %v642 = vld [vmem:[%s638 + $0xc] sm:$0xf]
      %v643 = vunpack.c.l.bf16 %v639
      %v644 = vunpack.c.l.bf16 %v640
      %v645 = vunpack.c.l.bf16 %v641
      %v646 = vunpack.c.l.bf16 %v642
      %v647 = vadd.f32 %v643, %v610
      %v648 = vadd.f32 %v644, %v615
      %v649 = vadd.f32 %v645, %v620
      %v650 = vadd.f32 %v646, %v625
      %v651 = vpack.c.bf16 %v648, %v647
      %v652 = vpack.c.bf16 %v650, %v649
      %v655 = vunpack.c.l.b16 %v651
      %v656 = vunpack.c.h.b16 %v651
      %v657 = vunpack.c.l.b16 %v652
      %v658 = vunpack.c.h.b16 %v652
      %v659 = vpack.c.b16 %v655, %v655
      %v660 = vpack.c.b16 %v656, %v656
      %v661 = vpack.c.b16 %v657, %v657
      %v662 = vpack.c.b16 %v658, %v658
      %s667 = scalar_lea.vmem %s312, 16
      %668 = vst.msk [vmem:[%s667] sm:$0xf] %vm518, %v659
      %669 = vst.msk [vmem:[%s667 + $0x4] sm:$0xf] %vm518, %v660
      %670 = vst.msk [vmem:[%s667 + $0x8] sm:$0xf] %vm518, %v661
      %671 = vst.msk [vmem:[%s667 + $0xc] sm:$0xf] %vm518, %v662
      %v672 = vpack.c.bf16 %v635, %v630
      %v674 = vunpack.c.l.b16 %v672
      %v675 = vunpack.c.h.b16 %v672
      %v676 = vpack.c.b16 %v674, %v674
      %v677 = vpack.c.b16 %v675, %v675
      %s680 = scalar_lea.vmem %s322, 8
      %681 = vst.msk [vmem:[%s680] sm:$0xf] %vm518, %v676
      %682 = vst.msk [vmem:[%s680 + $0x4] sm:$0xf] %vm518, %v677
      %s683 = scalar_lea.vmem %s292, 24
      %v684 = vld [vmem:[%s683] sm:$0xf]
      %v685 = vld [vmem:[%s683 + $0x4] sm:$0xf]
      %v686 = vld [vmem:[%s683 + $0x8] sm:$0x1]
      %v687 = vunpack.c.l.bf16 %v684
      %v688 = vunpack.c.l.bf16 %v685
      %v689 = vunpack.c.l.bf16 %v686
      %v691 = vsel %vm391, %v689, 0
      %693 = vmatprep.subr.mxu0 0.0
      %694 = vmatpush1.msra.mxu0 %v687
      %695 = vmatprep.subr.mxu0 0.0
      %696 = vmatpush1.msra.mxu0 %v688
      %697 = vmatprep.subr.mxu0 0.0
      %698 = vmatpush1.msra.mxu0 %v691
      %699 = vmatprep.subr.mxu0 0.0
      %700 = vmatpush1.msra.mxu0 0.0
      %701 = vmatprep.subr.mxu0 0.0
      %702 = vmatpush1.msra.mxu0 0.0
      %703 = vmatprep.subr.mxu0 0.0
      %704 = vmatpush1.msra.mxu0 0.0
      %705 = vmatprep.subr.mxu0 0.0
      %706 = vmatpush1.msra.mxu0 0.0
      %707 = vmatprep.subr.mxu0 0.0
      %708 = vmatpush1.msra.mxu0 0.0
      %709 = vmatprep.subr.mxu0 0.0
      %710 = vmatpush1.msra.mxu0 0.0
      %711 = vmatprep.subr.mxu0 0.0
      %712 = vmatpush1.msra.mxu0 0.0
      %713 = vmatprep.subr.mxu0 0.0
      %714 = vmatpush1.msra.mxu0 0.0
      %715 = vmatprep.subr.mxu0 0.0
      %716 = vmatpush1.msra.mxu0 0.0
      %717 = vmatprep.subr.mxu0 0.0
      %718 = vmatpush1.msra.mxu0 0.0
      %719 = vmatprep.subr.mxu0 0.0
      %720 = vmatpush1.msra.mxu0 0.0
      %721 = vmatprep.subr.mxu0 0.0
      %722 = vmatpush1.msra.mxu0 0.0
      %723 = vmatprep.subr.mxu0 0.0
      %724 = vmatpush1.msra.mxu0 0.0
      %725 = vmatprep.subr.mxu0 0.0
      %726 = vmatpush1.msra.mxu0 0.0
      %727 = vmatprep.subr.mxu0 0.0
      %728 = vmatpush1.msra.mxu0 0.0
      %729 = vmatprep.subr.mxu0 0.0
      %730 = vmatpush1.msra.mxu0 0.0
      %731 = vmatprep.subr.mxu0 0.0
      %732 = vmatpush1.msra.mxu0 0.0
      %733 = vmatprep.subr.mxu0 0.0
      %734 = vmatpush1.msra.mxu0 0.0
      %735 = vmatprep.subr.mxu0 0.0
      %736 = vmatpush1.msra.mxu0 0.0
      %737 = vmatprep.subr.mxu0 0.0
      %738 = vmatpush1.msra.mxu0 0.0
      %739 = vmatprep.subr.mxu0 0.0
      %740 = vmatpush1.msra.mxu0 0.0
      %741 = vmatprep.subr.mxu0 0.0
      %742 = vmatpush1.msra.mxu0 0.0
      %743 = vmatprep.subr.mxu0 0.0
      %744 = vmatpush1.msra.mxu0 0.0
      %745 = vmatprep.subr.mxu0 0.0
      %746 = vmatpush1.msra.mxu0 0.0
      %747 = vmatprep.subr.mxu0 0.0
      %748 = vmatpush1.msra.mxu0 0.0
      %749 = vmatprep.subr.mxu0 0.0
      %750 = vmatpush1.msra.mxu0 0.0
      %751 = vmatprep.subr.mxu0 0.0
      %752 = vmatpush1.msra.mxu0 0.0
      %753 = vmatprep.subr.mxu0 0.0
      %754 = vmatpush1.msra.mxu0 0.0
      %755 = vmatprep.subr.mxu0 0.0
      %756 = vmatpush1.msra.mxu0 0.0
      %757 = vmatprep.mubr.f32.mxu0 0.0
      %758 = vmatmul.mubr.f32.gmra.mrb[0].mxu0 %v374
      %v759 = vpop.f32.mrb[0].mxu0
      %v760 = vadd.f32 %v345, %v759
      %v761 = vpop.f32.mrb[0].mxu0
      %762 = vmatprep.mubr.f32.mxu0 0.0
      %763 = vmatmul.mubr.f32.gmra.mrb[0].mxu0 %v377
      %v764 = vpop.f32.mrb[0].mxu0
      %v765 = vadd.f32 %v350, %v764
      %v766 = vpop.f32.mrb[0].mxu0
      %767 = vmatprep.mubr.f32.mxu0 0.0
      %768 = vmatmul.mubr.f32.gmra.mrb[0].mxu0 %v380
      %v769 = vpop.f32.mrb[0].mxu0
      %v770 = vadd.f32 %v355, %v769
      %v771 = vpop.f32.mrb[0].mxu0
      %772 = vmatprep.mubr.f32.mxu0 0.0
      %773 = vmatmul.mubr.f32.gmra.mrb[0].mxu0 %v383
      %v774 = vpop.f32.mrb[0].mxu0
      %v775 = vadd.f32 %v360, %v774
      %v776 = vpop.f32.mrb[0].mxu0
      %777 = vmatprep.mubr.f32.mxu0 0.0
      %778 = vmatmul.mubr.f32.gmra.mrb[0].mxu0 %v386
      %v779 = vpop.f32.mrb[0].mxu0
      %v780 = vadd.f32 %v365, %v779
      %v781 = vpop.f32.mrb[0].mxu0
      %782 = vmatprep.mubr.f32.mxu0 0.0
      %783 = vmatmul.mubr.f32.gmra.mrb[0].mxu0 %v389
      %v784 = vpop.f32.mrb[0].mxu0
      %v785 = vadd.f32 %v370, %v784
      %v786 = vpop.f32.mrb[0].mxu0
      %787 = vdwg.mxu0
      %s788 = scalar_lea.vmem %s302, 32
      %v789 = vld [vmem:[%s788] sm:$0xf]
      %v790 = vld [vmem:[%s788 + $0x4] sm:$0xf]
      %v791 = vld [vmem:[%s788 + $0x8] sm:$0xf]
      %v792 = vld [vmem:[%s788 + $0xc] sm:$0xf]
      %v793 = vunpack.c.l.bf16 %v789
      %v794 = vunpack.c.l.bf16 %v790
      %v795 = vunpack.c.l.bf16 %v791
      %v796 = vunpack.c.l.bf16 %v792
      %v797 = vadd.f32 %v793, %v760
      %v798 = vadd.f32 %v794, %v765
      %v799 = vadd.f32 %v795, %v770
      %v800 = vadd.f32 %v796, %v775
      %v801 = vpack.c.bf16 %v798, %v797
      %v802 = vpack.c.bf16 %v800, %v799
      %v805 = vunpack.c.l.b16 %v801
      %v806 = vunpack.c.h.b16 %v801
      %v807 = vunpack.c.l.b16 %v802
      %v808 = vunpack.c.h.b16 %v802
      %v809 = vpack.c.b16 %v805, %v805
      %v810 = vpack.c.b16 %v806, %v806
      %v811 = vpack.c.b16 %v807, %v807
      %v812 = vpack.c.b16 %v808, %v808
      %s817 = scalar_lea.vmem %s312, 32
      %818 = vst.msk [vmem:[%s817] sm:$0xf] %vm518, %v809
      %819 = vst.msk [vmem:[%s817 + $0x4] sm:$0xf] %vm518, %v810
      %820 = vst.msk [vmem:[%s817 + $0x8] sm:$0xf] %vm518, %v811
      %821 = vst.msk [vmem:[%s817 + $0xc] sm:$0xf] %vm518, %v812
      %v822 = vpack.c.bf16 %v785, %v780
      %v824 = vunpack.c.l.b16 %v822
      %v825 = vunpack.c.h.b16 %v822
      %v826 = vpack.c.b16 %v824, %v824
      %v827 = vpack.c.b16 %v825, %v825
      %s830 = scalar_lea.vmem %s322, 16
      %831 = vst.msk [vmem:[%s830] sm:$0xf] %vm518, %v826
      %832 = vst.msk [vmem:[%s830 + $0x4] sm:$0xf] %vm518, %v827
      %s833 = scalar_lea.vmem %s292, 36
      %v834 = vld [vmem:[%s833] sm:$0xf]
      %v835 = vld [vmem:[%s833 + $0x4] sm:$0xf]
      %v836 = vld [vmem:[%s833 + $0x8] sm:$0x1]
      %v837 = vunpack.c.l.bf16 %v834
      %v838 = vunpack.c.l.bf16 %v835
      %v839 = vunpack.c.l.bf16 %v836
      %v841 = vsel %vm391, %v839, 0
      %843 = vmatprep.subr.mxu0 0.0
      %844 = vmatpush1.msra.mxu0 %v837
      %845 = vmatprep.subr.mxu0 0.0
      %846 = vmatpush1.msra.mxu0 %v838
      %847 = vmatprep.subr.mxu0 0.0
      %848 = vmatpush1.msra.mxu0 %v841
      %849 = vmatprep.subr.mxu0 0.0
      %850 = vmatpush1.msra.mxu0 0.0
      %851 = vmatprep.subr.mxu0 0.0
      %852 = vmatpush1.msra.mxu0 0.0
      %853 = vmatprep.subr.mxu0 0.0
      %854 = vmatpush1.msra.mxu0 0.0
      %855 = vmatprep.subr.mxu0 0.0
      %856 = vmatpush1.msra.mxu0 0.0
      %857 = vmatprep.subr.mxu0 0.0
      %858 = vmatpush1.msra.mxu0 0.0
      %859 = vmatprep.subr.mxu0 0.0
      %860 = vmatpush1.msra.mxu0 0.0
      %861 = vmatprep.subr.mxu0 0.0
      %862 = vmatpush1.msra.mxu0 0.0
      %863 = vmatprep.subr.mxu0 0.0
      %864 = vmatpush1.msra.mxu0 0.0
      %865 = vmatprep.subr.mxu0 0.0
      %866 = vmatpush1.msra.mxu0 0.0
      %867 = vmatprep.subr.mxu0 0.0
      %868 = vmatpush1.msra.mxu0 0.0
      %869 = vmatprep.subr.mxu0 0.0
      %870 = vmatpush1.msra.mxu0 0.0
      %871 = vmatprep.subr.mxu0 0.0
      %872 = vmatpush1.msra.mxu0 0.0
      %873 = vmatprep.subr.mxu0 0.0
      %874 = vmatpush1.msra.mxu0 0.0
      %875 = vmatprep.subr.mxu0 0.0
      %876 = vmatpush1.msra.mxu0 0.0
      %877 = vmatprep.subr.mxu0 0.0
      %878 = vmatpush1.msra.mxu0 0.0
      %879 = vmatprep.subr.mxu0 0.0
      %880 = vmatpush1.msra.mxu0 0.0
      %881 = vmatprep.subr.mxu0 0.0
      %882 = vmatpush1.msra.mxu0 0.0
      %883 = vmatprep.subr.mxu0 0.0
      %884 = vmatpush1.msra.mxu0 0.0
      %885 = vmatprep.subr.mxu0 0.0
      %886 = vmatpush1.msra.mxu0 0.0
      %887 = vmatprep.subr.mxu0 0.0
      %888 = vmatpush1.msra.mxu0 0.0
      %889 = vmatprep.subr.mxu0 0.0
      %890 = vmatpush1.msra.mxu0 0.0
      %891 = vmatprep.subr.mxu0 0.0
      %892 = vmatpush1.msra.mxu0 0.0
      %893 = vmatprep.subr.mxu0 0.0
      %894 = vmatpush1.msra.mxu0 0.0
      %895 = vmatprep.subr.mxu0 0.0
      %896 = vmatpush1.msra.mxu0 0.0
      %897 = vmatprep.subr.mxu0 0.0
      %898 = vmatpush1.msra.mxu0 0.0
      %899 = vmatprep.subr.mxu0 0.0
      %900 = vmatpush1.msra.mxu0 0.0
      %901 = vmatprep.subr.mxu0 0.0
      %902 = vmatpush1.msra.mxu0 0.0
      %903 = vmatprep.subr.mxu0 0.0
      %904 = vmatpush1.msra.mxu0 0.0
      %905 = vmatprep.subr.mxu0 0.0
      %906 = vmatpush1.msra.mxu0 0.0
      %907 = vmatprep.mubr.f32.mxu0 0.0
      %908 = vmatmul.mubr.f32.gmra.mrb[0].mxu0 %v374
      %v909 = vpop.f32.mrb[0].mxu0
      %v910 = vadd.f32 %v345, %v909
      %v911 = vpop.f32.mrb[0].mxu0
      %912 = vmatprep.mubr.f32.mxu0 0.0
      %913 = vmatmul.mubr.f32.gmra.mrb[0].mxu0 %v377
      %v914 = vpop.f32.mrb[0].mxu0
      %v915 = vadd.f32 %v350, %v914
      %v916 = vpop.f32.mrb[0].mxu0
      %917 = vmatprep.mubr.f32.mxu0 0.0
      %918 = vmatmul.mubr.f32.gmra.mrb[0].mxu0 %v380
      %v919 = vpop.f32.mrb[0].mxu0
      %v920 = vadd.f32 %v355, %v919
      %v921 = vpop.f32.mrb[0].mxu0
      %922 = vmatprep.mubr.f32.mxu0 0.0
      %923 = vmatmul.mubr.f32.gmra.mrb[0].mxu0 %v383
      %v924 = vpop.f32.mrb[0].mxu0
      %v925 = vadd.f32 %v360, %v924
      %v926 = vpop.f32.mrb[0].mxu0
      %927 = vmatprep.mubr.f32.mxu0 0.0
      %928 = vmatmul.mubr.f32.gmra.mrb[0].mxu0 %v386
      %v929 = vpop.f32.mrb[0].mxu0
      %v930 = vadd.f32 %v365, %v929
      %v931 = vpop.f32.mrb[0].mxu0
      %932 = vmatprep.mubr.f32.mxu0 0.0
      %933 = vmatmul.mubr.f32.gmra.mrb[0].mxu0 %v389
      %v934 = vpop.f32.mrb[0].mxu0
      %v935 = vadd.f32 %v370, %v934
      %v936 = vpop.f32.mrb[0].mxu0
      %937 = vdwg.mxu0
      %s938 = scalar_lea.vmem %s302, 48
      %v939 = vld [vmem:[%s938] sm:$0xf]
      %v940 = vld [vmem:[%s938 + $0x4] sm:$0xf]
      %v941 = vld [vmem:[%s938 + $0x8] sm:$0xf]
      %v942 = vld [vmem:[%s938 + $0xc] sm:$0xf]
      %v943 = vunpack.c.l.bf16 %v939
      %v944 = vunpack.c.l.bf16 %v940
      %v945 = vunpack.c.l.bf16 %v941
      %v946 = vunpack.c.l.bf16 %v942
      %v947 = vadd.f32 %v943, %v910
      %v948 = vadd.f32 %v944, %v915
      %v949 = vadd.f32 %v945, %v920
      %v950 = vadd.f32 %v946, %v925
      %v951 = vpack.c.bf16 %v948, %v947
      %v952 = vpack.c.bf16 %v950, %v949
      %v955 = vunpack.c.l.b16 %v951
      %v956 = vunpack.c.h.b16 %v951
      %v957 = vunpack.c.l.b16 %v952
      %v958 = vunpack.c.h.b16 %v952
      %v959 = vpack.c.b16 %v955, %v955
      %v960 = vpack.c.b16 %v956, %v956
      %v961 = vpack.c.b16 %v957, %v957
      %v962 = vpack.c.b16 %v958, %v958
      %s967 = scalar_lea.vmem %s312, 48
      %968 = vst.msk [vmem:[%s967] sm:$0xf] %vm518, %v959
      %969 = vst.msk [vmem:[%s967 + $0x4] sm:$0xf] %vm518, %v960
      %970 = vst.msk [vmem:[%s967 + $0x8] sm:$0xf] %vm518, %v961
      %971 = vst.msk [vmem:[%s967 + $0xc] sm:$0xf] %vm518, %v962
      %v972 = vpack.c.bf16 %v935, %v930
      %v974 = vunpack.c.l.b16 %v972
      %v975 = vunpack.c.h.b16 %v972
      %v976 = vpack.c.b16 %v974, %v974
      %v977 = vpack.c.b16 %v975, %v975
      %s980 = scalar_lea.vmem %s322, 24
      %981 = vst.msk [vmem:[%s980] sm:$0xf] %vm518, %v976
      %982 = vst.msk [vmem:[%s980 + $0x4] sm:$0xf] %vm518, %v977
      %s983 = scalar_lea.vmem %s292, 48
      %v984 = vld [vmem:[%s983] sm:$0xf]
      %v985 = vld [vmem:[%s983 + $0x4] sm:$0xf]
      %v986 = vld [vmem:[%s983 + $0x8] sm:$0x1]
      %v987 = vunpack.c.l.bf16 %v984
      %v988 = vunpack.c.l.bf16 %v985
      %v989 = vunpack.c.l.bf16 %v986
      %v991 = vsel %vm391, %v989, 0
      %993 = vmatprep.subr.mxu0 0.0
      %994 = vmatpush1.msra.mxu0 %v987
      %995 = vmatprep.subr.mxu0 0.0
      %996 = vmatpush1.msra.mxu0 %v988
      %997 = vmatprep.subr.mxu0 0.0
      %998 = vmatpush1.msra.mxu0 %v991
      %999 = vmatprep.subr.mxu0 0.0
      %1000 = vmatpush1.msra.mxu0 0.0
      %1001 = vmatprep.subr.mxu0 0.0
      %1002 = vmatpush1.msra.mxu0 0.0
      %1003 = vmatprep.subr.mxu0 0.0
      %1004 = vmatpush1.msra.mxu0 0.0
      %1005 = vmatprep.subr.mxu0 0.0
      %1006 = vmatpush1.msra.mxu0 0.0
      %1007 = vmatprep.subr.mxu0 0.0
      %1008 = vmatpush1.msra.mxu0 0.0
      %1009 = vmatprep.subr.mxu0 0.0
      %1010 = vmatpush1.msra.mxu0 0.0
      %1011 = vmatprep.subr.mxu0 0.0
      %1012 = vmatpush1.msra.mxu0 0.0
      %1013 = vmatprep.subr.mxu0 0.0
      %1014 = vmatpush1.msra.mxu0 0.0
      %1015 = vmatprep.subr.mxu0 0.0
      %1016 = vmatpush1.msra.mxu0 0.0
      %1017 = vmatprep.subr.mxu0 0.0
      %1018 = vmatpush1.msra.mxu0 0.0
      %1019 = vmatprep.subr.mxu0 0.0
      %1020 = vmatpush1.msra.mxu0 0.0
      %1021 = vmatprep.subr.mxu0 0.0
      %1022 = vmatpush1.msra.mxu0 0.0
      %1023 = vmatprep.subr.mxu0 0.0
      %1024 = vmatpush1.msra.mxu0 0.0
      %1025 = vmatprep.subr.mxu0 0.0
      %1026 = vmatpush1.msra.mxu0 0.0
      %1027 = vmatprep.subr.mxu0 0.0
      %1028 = vmatpush1.msra.mxu0 0.0
      %1029 = vmatprep.subr.mxu0 0.0
      %1030 = vmatpush1.msra.mxu0 0.0
      %1031 = vmatprep.subr.mxu0 0.0
      %1032 = vmatpush1.msra.mxu0 0.0
      %1033 = vmatprep.subr.mxu0 0.0
      %1034 = vmatpush1.msra.mxu0 0.0
      %1035 = vmatprep.subr.mxu0 0.0
      %1036 = vmatpush1.msra.mxu0 0.0
      %1037 = vmatprep.subr.mxu0 0.0
      %1038 = vmatpush1.msra.mxu0 0.0
      %1039 = vmatprep.subr.mxu0 0.0
      %1040 = vmatpush1.msra.mxu0 0.0
      %1041 = vmatprep.subr.mxu0 0.0
      %1042 = vmatpush1.msra.mxu0 0.0
      %1043 = vmatprep.subr.mxu0 0.0
      %1044 = vmatpush1.msra.mxu0 0.0
      %1045 = vmatprep.subr.mxu0 0.0
      %1046 = vmatpush1.msra.mxu0 0.0
      %1047 = vmatprep.subr.mxu0 0.0
      %1048 = vmatpush1.msra.mxu0 0.0
      %1049 = vmatprep.subr.mxu0 0.0
      %1050 = vmatpush1.msra.mxu0 0.0
      %1051 = vmatprep.subr.mxu0 0.0
      %1052 = vmatpush1.msra.mxu0 0.0
      %1053 = vmatprep.subr.mxu0 0.0
      %1054 = vmatpush1.msra.mxu0 0.0
      %1055 = vmatprep.subr.mxu0 0.0
      %1056 = vmatpush1.msra.mxu0 0.0
      %1057 = vmatprep.mubr.f32.mxu0 0.0
      %1058 = vmatmul.mubr.f32.gmra.mrb[0].mxu0 %v374
      %v1059 = vpop.f32.mrb[0].mxu0
      %v1060 = vadd.f32 %v345, %v1059
      %v1061 = vpop.f32.mrb[0].mxu0
      %1062 = vmatprep.mubr.f32.mxu0 0.0
      %1063 = vmatmul.mubr.f32.gmra.mrb[0].mxu0 %v377
      %v1064 = vpop.f32.mrb[0].mxu0
      %v1065 = vadd.f32 %v350, %v1064
      %v1066 = vpop.f32.mrb[0].mxu0
      %1067 = vmatprep.mubr.f32.mxu0 0.0
      %1068 = vmatmul.mubr.f32.gmra.mrb[0].mxu0 %v380
      %v1069 = vpop.f32.mrb[0].mxu0
      %v1070 = vadd.f32 %v355, %v1069
      %v1071 = vpop.f32.mrb[0].mxu0
      %1072 = vmatprep.mubr.f32.mxu0 0.0
      %1073 = vmatmul.mubr.f32.gmra.mrb[0].mxu0 %v383
      %v1074 = vpop.f32.mrb[0].mxu0
      %v1075 = vadd.f32 %v360, %v1074
      %v1076 = vpop.f32.mrb[0].mxu0
      %1077 = vmatprep.mubr.f32.mxu0 0.0
      %1078 = vmatmul.mubr.f32.gmra.mrb[0].mxu0 %v386
      %v1079 = vpop.f32.mrb[0].mxu0
      %v1080 = vadd.f32 %v365, %v1079
      %v1081 = vpop.f32.mrb[0].mxu0
      %1082 = vmatprep.mubr.f32.mxu0 0.0
      %1083 = vmatmul.mubr.f32.gmra.mrb[0].mxu0 %v389
      %v1084 = vpop.f32.mrb[0].mxu0
      %v1085 = vadd.f32 %v370, %v1084
      %v1086 = vpop.f32.mrb[0].mxu0
      %1087 = vdwg.mxu0
      %s1088 = scalar_lea.vmem %s302, 64
      %v1089 = vld [vmem:[%s1088] sm:$0xf]
      %v1090 = vld [vmem:[%s1088 + $0x4] sm:$0xf]
      %v1091 = vld [vmem:[%s1088 + $0x8] sm:$0xf]
      %v1092 = vld [vmem:[%s1088 + $0xc] sm:$0xf]
      %v1093 = vunpack.c.l.bf16 %v1089
      %v1094 = vunpack.c.l.bf16 %v1090
      %v1095 = vunpack.c.l.bf16 %v1091
      %v1096 = vunpack.c.l.bf16 %v1092
      %v1097 = vadd.f32 %v1093, %v1060
      %v1098 = vadd.f32 %v1094, %v1065
      %v1099 = vadd.f32 %v1095, %v1070
      %v1100 = vadd.f32 %v1096, %v1075
      %v1101 = vpack.c.bf16 %v1098, %v1097
      %v1102 = vpack.c.bf16 %v1100, %v1099
      %v1105 = vunpack.c.l.b16 %v1101
      %v1106 = vunpack.c.h.b16 %v1101
      %v1107 = vunpack.c.l.b16 %v1102
      %v1108 = vunpack.c.h.b16 %v1102
      %v1109 = vpack.c.b16 %v1105, %v1105
      %v1110 = vpack.c.b16 %v1106, %v1106
      %v1111 = vpack.c.b16 %v1107, %v1107
      %v1112 = vpack.c.b16 %v1108, %v1108
      %s1117 = scalar_lea.vmem %s312, 64
      %1118 = vst.msk [vmem:[%s1117] sm:$0xf] %vm518, %v1109
      %1119 = vst.msk [vmem:[%s1117 + $0x4] sm:$0xf] %vm518, %v1110
      %1120 = vst.msk [vmem:[%s1117 + $0x8] sm:$0xf] %vm518, %v1111
      %1121 = vst.msk [vmem:[%s1117 + $0xc] sm:$0xf] %vm518, %v1112
      %v1122 = vpack.c.bf16 %v1085, %v1080
      %v1124 = vunpack.c.l.b16 %v1122
      %v1125 = vunpack.c.h.b16 %v1122
      %v1126 = vpack.c.b16 %v1124, %v1124
      %v1127 = vpack.c.b16 %v1125, %v1125
      %s1130 = scalar_lea.vmem %s322, 32
      %1131 = vst.msk [vmem:[%s1130] sm:$0xf] %vm518, %v1126
      %1132 = vst.msk [vmem:[%s1130 + $0x4] sm:$0xf] %vm518, %v1127
      %s1133 = smul.u32 5, %s21
      %p1134 = scmp.lt.s32.totalorder %s1133, 9
      %s1135 = scalar_select %p1134, %s1133, 9
      %p1136 = scmp.lt.s32.totalorder %s22, 0
      %s1137 = scalar_select %p1136, %s22, 0
      %s1138 = smul.addr %s1135, 4
      %s1139 = sadd.s32 %s1137, %s1138
      %s1140 = smul.addr %s1139, 4
      %s1141 = scalar_lea.vmem %s4, %s1140
      %s1142 = smul.u32 5, %s21
      %p1143 = scmp.lt.s32.totalorder %s1142, 9
      %s1144 = scalar_select %p1143, %s1142, 9
      %p1145 = scmp.lt.s32.totalorder %s22, 0
      %s1146 = scalar_select %p1145, %s22, 0
      %s1147 = smul.addr %s1144, 2
      %s1148 = sadd.s32 %s1146, %s1147
      %s1149 = smul.addr %s1148, 4
      %s1150 = scalar_lea.vmem %s5, %s1149
      // Predicated region
      $region37: #{_forward_impl.1} parent=35 // pred_check
        %p1151 = pneg %p147
      $region38: #{_forward_impl.1} parent=35 // pred_check_branch
        %1153 = sbr.rel (%p1151) target = $region40
      $region39: #{_forward_impl.1} parent=35 // pred_region
        %s1154 = smul.u32 5, %s21
      $region40: #{_forward_impl.1} parent=35 // pred_fallthru
        _
      // Predicated region
      $region41: #{_forward_impl.1} parent=35 // pred_check
        %p1155 = pneg %p175
      $region42: #{_forward_impl.1} parent=35 // pred_check_branch
        %1157 = sbr.rel (%p1155) target = $region44
      $region43: #{_forward_impl.1} parent=35 // pred_region
        %s1158 = smul.u32 5, %s21
      $region44: #{_forward_impl.1} parent=35 // pred_fallthru
        _
    $region36: #{_forward_impl.1} parent=5 // pred_fallthru
      _
    %p1159 = scmp.le.s32.totalorder 2, %s12
    // Predicated region
    $region45: #{_forward_impl.1} parent=5 // pred_check
      %p1160 = pneg %p1159
    $region46: #{_forward_impl.1} parent=5 // pred_check_branch
      %1162 = sbr.rel (%p1160) target = $region48
    $region47: #{_forward_impl.1} parent=5 // pred_region
      %s1163 = ssub.s32 %s12, 2
      // Predicated region
      $region49: #{_forward_impl.1} parent=47 // pred_check
        %p1164 = pneg %p153
      $region50: #{_forward_impl.1} parent=47 // pred_check_branch
        %1166 = sbr.rel (%p1164) target = $region52
      $region51: #{_forward_impl.1} parent=47 // pred_region
        %s1167 = smul.u32 5, %s23
        %p1168 = scmp.lt.s32.totalorder %s1167, 9
        %s1169 = scalar_select %p1168, %s1167, 9
        %p1170 = scmp.lt.s32.totalorder %s24, 0
        %s1171 = scalar_select %p1170, %s24, 0
        %s1172 = smul.addr %s1169, 4
        %s1173 = sadd.s32 %s1171, %s1172
        %s1174 = smul.addr %s1173, 4
        %s1175 = scalar_lea.vmem %s4, %s1174
      $region52: #{_forward_impl.1} parent=47 // pred_fallthru
        _
      // Predicated region
      $region53: #{_forward_impl.1} parent=47 // pred_check
        %p1176 = pneg %p181
      $region54: #{_forward_impl.1} parent=47 // pred_check_branch
        %1178 = sbr.rel (%p1176) target = $region56
      $region55: #{_forward_impl.1} parent=47 // pred_region
        %s1179 = smul.u32 5, %s23
        %p1180 = scmp.lt.s32.totalorder %s1179, 9
        %s1181 = scalar_select %p1180, %s1179, 9
        %p1182 = scmp.lt.s32.totalorder %s24, 0
        %s1183 = scalar_select %p1182, %s24, 0
        %s1184 = smul.addr %s1181, 2
        %s1185 = sadd.s32 %s1183, %s1184
        %s1186 = smul.addr %s1185, 4
        %s1187 = scalar_lea.vmem %s5, %s1186
      $region56: #{_forward_impl.1} parent=47 // pred_fallthru
        _
    $region48: #{_forward_impl.1} parent=5 // pred_fallthru
      _
  $region6: #{_forward_impl.1} parent=0 // loop_footer
    %s16 = sadd.s32 1, %s12
  $region7: #{_forward_impl.1} parent=0 // loop_footer_branch
    %11 = sbr.rel target = $region3
  $region8: #{_forward_impl.1} parent=0 // loop_exit
    _

</llo_original>
